<compile_context>
chip_gen: v7x
topology: tpu7x:2x2x1
jax: 0.10.0
libtpu: 0.0.40
codegen_flags: <defaults>
</compile_context>

<pallas_src>
import functools
import math

import jax
import jax.numpy as jnp
from jax.experimental import pallas as pl
from jax.experimental.pallas import tpu as pltpu


_TOKEN_TILE_CANDIDATES = (1024, 768, 512, 384, 256, 128)
_HIDDEN_TILE_CANDIDATES = (2048, 1024, 512, 256, 128)


def _gelu(h, approximate):
    if approximate:
        # tanh approximation: routes to the EUP slot instead of a long f32
        # VALU erf polynomial (opt-in; differs slightly from nn.GELU default).
        return jax.nn.gelu(h, approximate=True)
    # Exact GELU (PyTorch nn.GELU(approximate='none')).
    return 0.5 * h * (1.0 + jax.lax.erf(h * (1.0 / math.sqrt(2.0))))


# ----------------------------------------------------------------------------
# Kernels
# ----------------------------------------------------------------------------
def _mlp_kernel_resident(x_ref, lnp_ref, w1_ref, b1_ref, w2_ref, o_ref,
                         hid_ref, *, approximate):
    """Weights fully resident in VMEM; 1-D grid over token tiles."""
    # LayerNorm over channels (eps=1e-5, biased variance, like nn.LayerNorm).
    x = x_ref[...].astype(jnp.float32)
    mean = jnp.mean(x, axis=-1, keepdims=True)
    xc = x - mean
    var = jnp.mean(xc * xc, axis=-1, keepdims=True)
    h = xc * jax.lax.rsqrt(var + 1e-5)
    h = h * lnp_ref[0:1, :] + lnp_ref[1:2, :]          # gamma / beta

    # Linear(C -> H): bf16 MXU operands, f32 accumulation.
    g = jnp.dot(h.astype(jnp.bfloat16), w1_ref[...],
                preferred_element_type=jnp.float32) + b1_ref[...]
    g = _gelu(g, approximate)

    # Stage the second-matmul LHS as bf16 in VMEM: the (tm, H) intermediate
    # cannot live in vregs, so keep the spilled copy at half width.
    hid_ref[...] = g.astype(jnp.bfloat16)

    # Linear(H -> C): bf16 MXU operands, f32 accumulation; +b2 (lnp row 2).
    y = jnp.dot(hid_ref[...], w2_ref[...],
                preferred_element_type=jnp.float32) + lnp_ref[2:3, :]

    # Residual: re-read x tile from VMEM (cheaper than holding it in vregs).
    o_ref[...] = (x_ref[...].astype(jnp.float32) + y).astype(o_ref.dtype)


def _mlp_kernel_chunked(x_ref, lnp_ref, w1_ref, b1_ref, w2_ref, o_ref,
                        ln_ref, acc_ref, hid_ref, *, approximate):
    """H tiled on an inner "arbitrary" grid axis; weights streamed per chunk."""
    h_idx = pl.program_id(1)

    @pl.when(h_idx == 0)
    def _():
        x = x_ref[...].astype(jnp.float32)
        mean = jnp.mean(x, axis=-1, keepdims=True)
        xc = x - mean
        var = jnp.mean(xc * xc, axis=-1, keepdims=True)
        ln = xc * jax.lax.rsqrt(var + 1e-5)
        ln = ln * lnp_ref[0:1, :] + lnp_ref[1:2, :]
        ln_ref[...] = ln.astype(jnp.bfloat16)          # reused across H chunks
        acc_ref[...] = jnp.zeros_like(acc_ref)

    g = jnp.dot(ln_ref[...], w1_ref[...],
                preferred_element_type=jnp.float32) + b1_ref[...]
    g = _gelu(g, approximate)
    hid_ref[...] = g.astype(jnp.bfloat16)
    acc_ref[...] += jnp.dot(hid_ref[...], w2_ref[...],
                            preferred_element_type=jnp.float32)

    @pl.when(h_idx == pl.num_programs(1) - 1)
    def _():
        y = acc_ref[...] + lnp_ref[2:3, :]             # + b2
        o_ref[...] = (x_ref[...].astype(jnp.float32) + y).astype(o_ref.dtype)


# ----------------------------------------------------------------------------
# Build-time sizing helpers
# ----------------------------------------------------------------------------
def _vmem_budget():
    cap = None
    try:
        info = pltpu.get_tpu_info()
        cap = getattr(info, "vmem_capacity_bytes", None)
    except Exception:
        cap = None
    if not cap:
        cap = 64 * 1024 * 1024          # conservative default: v7x per-TC VMEM
    budget = int(cap * 0.70)            # planning budget (leaves compiler slack)
    limit = int(cap * 0.85)             # scoped-VMEM limit handed to Mosaic
    return budget, limit


def _resident_vmem_bytes(tm, C, H, x_item):
    weights = 2 * C * H * 2                     # W1 + W2 bf16, single-buffered
    params = (3 * C + H) * 4                    # packed LN params + b1 (f32)
    xio = 2 * tm * C * x_item * 2               # x in + out, double-buffered
    interm = tm * H * (4 + 2)                   # f32 matmul result + bf16 GELU scratch
    misc = 2 * tm * C * 4                       # LN / residual temporaries
    return weights + params + xio + interm + misc


def _chunked_vmem_bytes(tm, th, C, H, x_item):
    weights = 2 * (C * th * 2 + th * C * 2 + th * 4)   # dbl-buffered W1/W2 (bf16) + b1 chunk
    params = 3 * C * 4
    xio = 2 * tm * C * x_item * 2
    scratch = tm * C * 2 + tm * C * 4 + tm * th * 2    # ln bf16 + acc f32 + hid bf16
    interm = tm * th * 4
    misc = 2 * tm * C * 4
    return weights + params + xio + scratch + interm + misc


def _pick_tm(N, fits):
    if N <= 128:
        return max(8, ((N + 7) // 8) * 8)
    cands = [t for t in _TOKEN_TILE_CANDIDATES if t <= N and fits(t)]
    if not cands:
        cands = [128]
    divs = [t for t in cands if N % t == 0]
    if divs:
        # Largest divisor that still leaves >=2 grid steps so both v7x
        # TensorCores get work under the "parallel" token axis.
        multi = [t for t in divs if N // t >= 2]
        return multi[0] if multi else divs[0]
    # Ragged N: minimize padded waste; prefer larger tiles on ties.
    return min(cands, key=lambda t: (pl.cdiv(N, t) * t, -t))


def _const_block_spec(shape, grid_rank):
    """Grid-invariant operand: single-buffer it (no re-DMA after step 0)."""
    if grid_rank == 1:
        index_map = lambda i: (0,) * len(shape)
    else:
        index_map = lambda i, h: (0,) * len(shape)
    try:
        return pl.BlockSpec(shape, index_map, pipeline_mode=pl.Buffered(1))
    except TypeError:  # older BlockSpec without pipeline_mode: fall back.
        return pl.BlockSpec(shape, index_map)


# ----------------------------------------------------------------------------
# Wrapper
# ----------------------------------------------------------------------------
def mlp_pallas(x, gamma, beta, w1, b1, w2, b2, *,
               approximate_gelu=False, tm=None, th=None, force_chunked=False):
    """x: (..., C). w1: (C, H), w2: (H, C) stored as (in, out). Returns x + MLP(x)."""
    orig_shape = x.shape
    C = x.shape[-1]
    H = w1.shape[1]
    N = 1
    for d in orig_shape[:-1]:
        N *= d

    x_item = jnp.dtype(x.dtype).itemsize
    budget, vmem_limit = _vmem_budget()

    weight_bytes = 2 * C * H * 2   # single-buffered bf16 W1 + W2
    use_chunked = force_chunked or weight_bytes > int(0.6 * budget)

    th_sel = None
    if use_chunked:
        if th is not None and H % th == 0:
            th_sel = th
        else:
            for cand in _HIDDEN_TILE_CANDIDATES:
                if H % cand == 0:
                    th_sel = cand
                    break
        if th_sel is None:
            # TODO(synk): pad H to a tileable size; fall back to resident weights.
            use_chunked = False

    if use_chunked:
        fits = lambda t: _chunked_vmem_bytes(t, th_sel, C, H, x_item) <= budget
    else:
        fits = lambda t: _resident_vmem_bytes(t, C, H, x_item) <= budget
    tm_sel = tm if tm is not None else _pick_tm(N, fits)

    grid_m = pl.cdiv(N, tm_sel)
    Np = grid_m * tm_sel

    x2 = x.reshape(N, C)
    if Np != N:
        # Ragged tail fallback: zero-pad (LN of a zero row is finite; padded
        # rows are sliced off below).  Avoided whenever tm | N.
        x2 = jnp.pad(x2, ((0, Np - N), (0, 0)))

    # bf16 weights for the MXU (halves weight VMEM + DMA); params stay f32.
    w1b = w1.astype(jnp.bfloat16)
    w2b = w2.astype(jnp.bfloat16)
    # gamma / beta / b2 packed into one (3, C) f32 block: one DMA, one buffer.
    lnp = jnp.stack([gamma.astype(jnp.float32),
                     beta.astype(jnp.float32),
                     b2.astype(jnp.float32)], axis=0)
    b1_2 = b1.reshape(1, H).astype(jnp.float32)

    cost = pl.CostEstimate(
        flops=int(4 * Np * C * H),                    # two (M,K)x(K,N) matmuls
        transcendentals=int(Np * H),                  # erf/tanh per hidden act
        bytes_accessed=int(2 * Np * C * x_item        # x in + out
                           + 2 * C * H * 2            # bf16 weights
                           + (3 * C + H) * 4),        # packed params + b1
    )

    if use_chunked:
        grid = (grid_m, H // th_sel)
        in_specs = [
            pl.BlockSpec((tm_sel, C), lambda i, h: (i, 0)),       # x tile
            _const_block_spec((3, C), 2),                         # gamma/beta/b2
            pl.BlockSpec((C, th_sel), lambda i, h: (0, h)),       # W1 chunk
            pl.BlockSpec((1, th_sel), lambda i, h: (0, h)),       # b1 chunk
            pl.BlockSpec((th_sel, C), lambda i, h: (h, 0)),       # W2 chunk
        ]
        out_spec = pl.BlockSpec((tm_sel, C), lambda i, h: (i, 0))
        scratch = [
            pltpu.VMEM((tm_sel, C), jnp.bfloat16),     # cached LayerNorm output
            pltpu.VMEM((tm_sel, C), jnp.float32),      # output accumulator
            pltpu.VMEM((tm_sel, th_sel), jnp.bfloat16),  # bf16 GELU staging
        ]
        kernel = functools.partial(_mlp_kernel_chunked, approximate=approximate_gelu)
        semantics = ("parallel", "arbitrary")
    else:
        grid = (grid_m,)
        in_specs = [
            pl.BlockSpec((tm_sel, C), lambda i: (i, 0)),          # x tile
            _const_block_spec((3, C), 1),                         # gamma/beta/b2
            _const_block_spec((C, H), 1),                         # W1 (bf16)
            _const_block_spec((1, H), 1),                         # b1
            _const_block_spec((H, C), 1),                         # W2 (bf16)
        ]
        out_spec = pl.BlockSpec((tm_sel, C), lambda i: (i, 0))
        scratch = [pltpu.VMEM((tm_sel, H), jnp.bfloat16)]         # bf16 GELU staging
        kernel = functools.partial(_mlp_kernel_resident, approximate=approximate_gelu)
        semantics = ("parallel",)

    out = pl.pallas_call(
        kernel,
        out_shape=jax.ShapeDtypeStruct((Np, C), x.dtype),
        grid_spec=pltpu.PrefetchScalarGridSpec(
            num_scalar_prefetch=0,
            grid=grid,
            in_specs=in_specs,
            out_specs=out_spec,
            scratch_shapes=scratch,
        ),
        compiler_params=pltpu.CompilerParams(
            dimension_semantics=semantics,
            vmem_limit_bytes=vmem_limit,
        ),
        cost_estimate=cost,
    )(x2, lnp, w1b, b1_2, w2b)

    if Np != N:
        out = out[:N]
    return out.reshape(orig_shape)


def mlp_reference(x, gamma, beta, w1, b1, w2, b2):
    """Pure-JAX f32 reference matching the PyTorch module forward."""
    xf = x.astype(jnp.float32)
    mean = jnp.mean(xf, axis=-1, keepdims=True)
    var = jnp.mean((xf - mean) ** 2, axis=-1, keepdims=True)
    h = (xf - mean) * jax.lax.rsqrt(var + 1e-5) * gamma + beta
    h = h @ w1 + b1
    h = 0.5 * h * (1.0 + jax.lax.erf(h / jnp.sqrt(2.0)))
    h = h @ w2 + b2
    return (xf + h).astype(x.dtype)


if __name__ == "__main__":
    key = jax.random.PRNGKey(0)

    # Small but lane-dense / MXU-aligned shapes: C multiple of 128, N = 512.
    B, S, C = 2, 256, 128
    mult = 4
    H = mult * C

    k_x, k_w1, k_b1, k_w2, k_b2, k_xr = jax.random.split(key, 6)

    x = jax.random.normal(k_x, (B, S, C), dtype=jnp.float32)

    # Parameters matching nn.Module __init__ semantics:
    #   LayerNorm: gamma=1, beta=0; Linear(C,H): uniform(-1/sqrt(C), 1/sqrt(C));
    #   Linear(H,C): zero_module -> all zeros.
    gamma = jnp.ones((C,), dtype=jnp.float32)
    beta = jnp.zeros((C,), dtype=jnp.float32)

    bound1 = 1.0 / math.sqrt(C)
    w1 = jax.random.uniform(k_w1, (C, H), minval=-bound1, maxval=bound1,
                            dtype=jnp.float32)            # stored as (in, out)
    b1 = jax.random.uniform(k_b1, (H,), minval=-bound1, maxval=bound1,
                            dtype=jnp.float32)

    w2_zero = jnp.zeros((H, C), dtype=jnp.float32)
    b2_zero = jnp.zeros((C,), dtype=jnp.float32)

    # 1) Module-at-init (zero second linear): output must equal x exactly.
    out0 = jax.block_until_ready(
        mlp_pallas(x, gamma, beta, w1, b1, w2_zero, b2_zero))
    ref0 = mlp_reference(x, gamma, beta, w1, b1, w2_zero, b2_zero)
    assert out0.shape == (B, S, C)
    assert jnp.allclose(out0, ref0, atol=1e-6, rtol=1e-6), "zero-init mismatch"

    # 2) Non-zero second linear, weights-resident path (bf16 MXU -> loose tol).
    bound2 = 1.0 / math.sqrt(H)
    w2 = jax.random.uniform(k_w2, (H, C), minval=-bound2, maxval=bound2,
                            dtype=jnp.float32)
    b2 = jax.random.uniform(k_b2, (C,), minval=-bound2, maxval=bound2,
                            dtype=jnp.float32)

    out = jax.block_until_ready(mlp_pallas(x, gamma, beta, w1, b1, w2, b2))
    ref = mlp_reference(x, gamma, beta, w1, b1, w2, b2)
    assert out.shape == (B, S, C)
    assert jnp.allclose(out, ref, atol=5e-2, rtol=5e-2), "resident-path mismatch"

    # 3) H-chunked accumulator path (auto-selected for large C/H, esp. on v7x's
    #    64 MiB VMEM); forced here at small shapes to validate the math.
    outc = jax.block_until_ready(
        mlp_pallas(x, gamma, beta, w1, b1, w2, b2, force_chunked=True, th=128))
    assert jnp.allclose(outc, ref, atol=5e-2, rtol=5e-2), "chunked-path mismatch"

    # 4) Ragged token count (tm does not divide N) -> zero-pad fallback.
    xr = jax.random.normal(k_xr, (2, 96, C), dtype=jnp.float32)
    outr = jax.block_until_ready(mlp_pallas(xr, gamma, beta, w1, b1, w2, b2))
    refr = mlp_reference(xr, gamma, beta, w1, b1, w2, b2)
    assert outr.shape == (2, 96, C)
    assert jnp.allclose(outr, refr, atol=5e-2, rtol=5e-2), "ragged-N mismatch"

    print("KERNEL_OK")
</pallas_src>

<mosaic_0001>
module attributes {stable_mosaic.version = 11 : i64} {
  func.func @_mlp_kernel_resident(%arg0: i32, %arg1: memref<256x128xf32, #tpu.memory_space<vmem>>, %arg2: memref<3x128xf32, #tpu.memory_space<vmem>>, %arg3: memref<128x512xbf16, #tpu.memory_space<vmem>>, %arg4: memref<1x512xf32, #tpu.memory_space<vmem>>, %arg5: memref<512x128xbf16, #tpu.memory_space<vmem>>, %arg6: memref<256x128xf32, #tpu.memory_space<vmem>>, %arg7: memref<256x512xbf16, #tpu.memory_space<vmem>>) attributes {dimension_semantics = [#tpu.dimension_semantics<parallel>], iteration_bounds = array<i64: 2>, scalar_prefetch = 0 : i64, scratch_operands = 1 : i64, tpu.core_type = #tpu.core_type<tc>, window_params = [{transform_indices = @transform_0, window_bounds = array<i64: 256, 128>}, {pipeline_mode = #tpu.pipeline_mode<synchronous>, transform_indices = @transform_1, window_bounds = array<i64: 3, 128>}, {pipeline_mode = #tpu.pipeline_mode<synchronous>, transform_indices = @transform_2, window_bounds = array<i64: 128, 512>}, {pipeline_mode = #tpu.pipeline_mode<synchronous>, transform_indices = @transform_3, window_bounds = array<i64: 1, 512>}, {pipeline_mode = #tpu.pipeline_mode<synchronous>, transform_indices = @transform_4, window_bounds = array<i64: 512, 128>}, {transform_indices = @transform_5, window_bounds = array<i64: 256, 128>}]} {
    %c0 = arith.constant 0 : index
    %c0_0 = arith.constant 0 : index
    %0 = vector.load %arg1[%c0, %c0_0] : memref<256x128xf32, #tpu.memory_space<vmem>>, vector<256x128xf32>
    %cst = arith.constant dense<0.000000e+00> : vector<256xf32>
    %1 = vector.multi_reduction <add>, %0, %cst [1] : vector<256x128xf32> to vector<256xf32>
    %2 = vector.shape_cast %1 : vector<256xf32> to vector<256x1xf32>
    %cst_1 = arith.constant 1.280000e+02 : f32
    %3 = vector.broadcast %cst_1 : f32 to vector<256x1xf32>
    %4 = arith.divf %2, %3 : vector<256x1xf32>
    %5 = vector.broadcast %4 : vector<256x1xf32> to vector<256x128xf32>
    %6 = arith.subf %0, %5 : vector<256x128xf32>
    %7 = arith.mulf %6, %6 : vector<256x128xf32>
    %cst_2 = arith.constant dense<0.000000e+00> : vector<256xf32>
    %8 = vector.multi_reduction <add>, %7, %cst_2 [1] : vector<256x128xf32> to vector<256xf32>
    %9 = vector.shape_cast %8 : vector<256xf32> to vector<256x1xf32>
    %cst_3 = arith.constant 1.280000e+02 : f32
    %10 = vector.broadcast %cst_3 : f32 to vector<256x1xf32>
    %11 = arith.divf %9, %10 : vector<256x1xf32>
    %cst_4 = arith.constant 9.99999974E-6 : f32
    %12 = vector.broadcast %cst_4 : f32 to vector<256x1xf32>
    %13 = arith.addf %11, %12 : vector<256x1xf32>
    %14 = math.rsqrt %13 : vector<256x1xf32>
    %15 = vector.broadcast %14 : vector<256x1xf32> to vector<256x128xf32>
    %16 = arith.mulf %6, %15 : vector<256x128xf32>
    %c0_5 = arith.constant 0 : index
    %c0_6 = arith.constant 0 : index
    %17 = vector.load %arg2[%c0_5, %c0_6] : memref<3x128xf32, #tpu.memory_space<vmem>>, vector<1x128xf32>
    %18 = vector.broadcast %17 : vector<1x128xf32> to vector<256x128xf32>
    %19 = arith.mulf %16, %18 : vector<256x128xf32>
    %c1 = arith.constant 1 : index
    %c0_7 = arith.constant 0 : index
    %20 = vector.load %arg2[%c1, %c0_7] : memref<3x128xf32, #tpu.memory_space<vmem>>, vector<1x128xf32>
    %21 = vector.broadcast %20 : vector<1x128xf32> to vector<256x128xf32>
    %22 = arith.addf %19, %21 : vector<256x128xf32>
    %23 = arith.truncf %22 : vector<256x128xf32> to vector<256x128xbf16>
    %c0_8 = arith.constant 0 : index
    %c0_9 = arith.constant 0 : index
    %24 = vector.load %arg3[%c0_8, %c0_9] : memref<128x512xbf16, #tpu.memory_space<vmem>>, vector<128x512xbf16>
    %cst_10 = arith.constant dense<0.000000e+00> : vector<256x512xf32>
    %25 = tpu.matmul %23, %24, %cst_10 {dimension_numbers = #tpu.dot_dimension_numbers<[1], [0], [0], [1], [0, 0, 1, 1], [], []>} : vector<256x128xbf16>, vector<128x512xbf16>, vector<256x512xf32> -> vector<256x512xf32>
    %c0_11 = arith.constant 0 : index
    %c0_12 = arith.constant 0 : index
    %26 = vector.load %arg4[%c0_11, %c0_12] : memref<1x512xf32, #tpu.memory_space<vmem>>, vector<1x512xf32>
    %27 = vector.broadcast %26 : vector<1x512xf32> to vector<256x512xf32>
    %28 = arith.addf %25, %27 : vector<256x512xf32>
    %cst_13 = arith.constant 5.000000e-01 : f32
    %29 = vector.broadcast %cst_13 : f32 to vector<256x512xf32>
    %30 = arith.mulf %29, %28 : vector<256x512xf32>
    %cst_14 = arith.constant 0.707106769 : f32
    %31 = vector.broadcast %cst_14 : f32 to vector<256x512xf32>
    %32 = arith.mulf %28, %31 : vector<256x512xf32>
    %33 = math.erf %32 : vector<256x512xf32>
    %cst_15 = arith.constant 1.000000e+00 : f32
    %34 = vector.broadcast %cst_15 : f32 to vector<256x512xf32>
    %35 = arith.addf %34, %33 : vector<256x512xf32>
    %36 = arith.mulf %30, %35 : vector<256x512xf32>
    %37 = arith.truncf %36 : vector<256x512xf32> to vector<256x512xbf16>
    %c0_16 = arith.constant 0 : index
    %c0_17 = arith.constant 0 : index
    %38 = vector.load %arg7[%c0_16, %c0_17] : memref<256x512xbf16, #tpu.memory_space<vmem>>, vector<256x512xbf16>
    tpu.vector_store %arg7[%c0_16, %c0_17], %37 {strides = array<i32>} : memref<256x512xbf16, #tpu.memory_space<vmem>>, vector<256x512xbf16>,
    %c0_18 = arith.constant 0 : index
    %c0_19 = arith.constant 0 : index
    %39 = vector.load %arg7[%c0_18, %c0_19] : memref<256x512xbf16, #tpu.memory_space<vmem>>, vector<256x512xbf16>
    %c0_20 = arith.constant 0 : index
    %c0_21 = arith.constant 0 : index
    %40 = vector.load %arg5[%c0_20, %c0_21] : memref<512x128xbf16, #tpu.memory_space<vmem>>, vector<512x128xbf16>
    %cst_22 = arith.constant dense<0.000000e+00> : vector<256x128xf32>
    %41 = tpu.matmul %39, %40, %cst_22 {dimension_numbers = #tpu.dot_dimension_numbers<[1], [0], [0], [1], [0, 0, 1, 1], [], []>} : vector<256x512xbf16>, vector<512x128xbf16>, vector<256x128xf32> -> vector<256x128xf32>
    %c2 = arith.constant 2 : index
    %c0_23 = arith.constant 0 : index
    %42 = vector.load %arg2[%c2, %c0_23] : memref<3x128xf32, #tpu.memory_space<vmem>>, vector<1x128xf32>
    %43 = vector.broadcast %42 : vector<1x128xf32> to vector<256x128xf32>
    %44 = arith.addf %41, %43 : vector<256x128xf32>
    %c0_24 = arith.constant 0 : index
    %c0_25 = arith.constant 0 : index
    %45 = vector.load %arg1[%c0_24, %c0_25] : memref<256x128xf32, #tpu.memory_space<vmem>>, vector<256x128xf32>
    %46 = arith.addf %45, %44 : vector<256x128xf32>
    %c0_26 = arith.constant 0 : index
    %c0_27 = arith.constant 0 : index
    %47 = vector.load %arg6[%c0_26, %c0_27] : memref<256x128xf32, #tpu.memory_space<vmem>>, vector<256x128xf32>
    tpu.vector_store %arg6[%c0_26, %c0_27], %46 {strides = array<i32>} : memref<256x128xf32, #tpu.memory_space<vmem>>, vector<256x128xf32>,
    return
  }
  func.func @transform_0(%arg0: i32) -> (i32, i32) {
    %c0_i32 = arith.constant 0 : i32
    %c0_i32_0 = arith.constant 0 : i32
    return %arg0, %c0_i32 : i32, i32
  }
  func.func @transform_1(%arg0: i32) -> (i32, i32) {
    %c0_i32 = arith.constant 0 : i32
    %c0_i32_0 = arith.constant 0 : i32
    %c0_i32_1 = arith.constant 0 : i32
    return %c0_i32, %c0_i32_0 : i32, i32
  }
  func.func @transform_2(%arg0: i32) -> (i32, i32) {
    %c0_i32 = arith.constant 0 : i32
    %c0_i32_0 = arith.constant 0 : i32
    %c0_i32_1 = arith.constant 0 : i32
    return %c0_i32, %c0_i32_0 : i32, i32
  }
  func.func @transform_3(%arg0: i32) -> (i32, i32) {
    %c0_i32 = arith.constant 0 : i32
    %c0_i32_0 = arith.constant 0 : i32
    %c0_i32_1 = arith.constant 0 : i32
    return %c0_i32, %c0_i32_0 : i32, i32
  }
  func.func @transform_4(%arg0: i32) -> (i32, i32) {
    %c0_i32 = arith.constant 0 : i32
    %c0_i32_0 = arith.constant 0 : i32
    %c0_i32_1 = arith.constant 0 : i32
    return %c0_i32, %c0_i32_0 : i32, i32
  }
  func.func @transform_5(%arg0: i32) -> (i32, i32) {
    %c0_i32 = arith.constant 0 : i32
    %c0_i32_0 = arith.constant 0 : i32
    return %arg0, %c0_i32 : i32, i32
  }
}

</mosaic_0001>

<llo_original>
// kernel: tpu_custom_call.1
$region0: #{tpu_custom_call.1}
  #allocation0 [shape = 'u32[]', space=smem, size = 0x4, offset = 0x4, fixed_abs, tag = 'smem constant byte address 0x4 - core index']
  #allocation1 [shape = 'u32[144,128]{1,0:T(1,128)}', space=vmem, size = 0x12000, scoped, tag = 'internal scratch']
  #allocation2 [shape = 'bf16[256,512]{1,0:T(16,128)(2,1)}', space=vmem, size = 0x40000, scoped, tag = 'scratch operand']
  %s0 = inlined_call_operand.hbm [shape: f32[512,128], index: 0, kind: input, shape index: {}]
  %s1 = inlined_call_operand.hbm [shape: f32[3,128], index: 1, kind: input, shape index: {}]
  %s2 = inlined_call_operand.hbm [shape: bf16[128,512], index: 2, kind: input, shape index: {}]
  %s3 = inlined_call_operand.vmem [shape: f32[1,512], index: 3, kind: input, shape index: {}]
  %s4 = inlined_call_operand.hbm [shape: bf16[512,128], index: 4, kind: input, shape index: {}]
  %s5 = inlined_call_operand.hbm [shape: f32[512,128], index: 5, kind: output, shape index: {}]
  %s6 = sld [smem:[#allocation0]]
  $region69: #{tpu_custom_call.1} parent=0
    _
  %s8 = ssub.s32 1, %s6
  %s9 = scalar_select 0, %s8, %s6
  $region1: #{tpu_custom_call.1} parent=0
    #allocation3 [shape = 'u8[262144]{0}', space=vmem, size = 0x40000, scoped, tag = 'input window, operand 0']
    #allocation4 [shape = 's32[2]{0}', space=sflag, size = 0x8, scoped, tag = 'scoped memory for tpu_custom_call.1']
    #allocation5 [shape = 's32[2]{0}', space=sflag, size = 0x8, scoped, tag = 'scoped memory for tpu_custom_call.1']
    #allocation6 [shape = 'u8[2048]{0}', space=vmem, size = 0x800, scoped, tag = 'input window, operand 1, single buffered']
    #allocation7 [shape = 's32[1]{0}', space=sflag, size = 0x4, scoped, tag = 'scoped memory for tpu_custom_call.1']
    #allocation8 [shape = 'u8[131072]{0}', space=vmem, size = 0x20000, scoped, tag = 'input window, operand 2, single buffered']
    #allocation9 [shape = 'u8[131072]{0}', space=vmem, size = 0x20000, scoped, tag = 'input window, operand 4, single buffered']
    #allocation10 [shape = 's32[1]{0}', space=sflag, size = 0x4, scoped, tag = 'scoped memory for tpu_custom_call.1']
    #allocation11 [shape = 'u8[262144]{0}', space=vmem, size = 0x40000, scoped, tag = 'output window, operand 0']
    %10 = vsyncpa [#allocation4], 0
    %s11 = scalar_lea.sflag [#allocation4], 1
    %12 = vsyncpa %s11, 0
    %13 = vsyncpa [#allocation7], 0
    %14 = vsyncpa [#allocation10], 0
    %15 = vsyncpa [#allocation5], 0
    %s16 = scalar_lea.sflag [#allocation5], 1
    %17 = vsyncpa %s16, 0
    loop: start=0, step=1, limit=4
    $region2: #{tpu_custom_call.1} parent=1 // loop_pre_header
      _
    $region3: #{tpu_custom_call.1} parent=1 // loop_header
      %s19 = sphi 0, %s23
      %p20 = scmp.ge.s32.totalorder %s19, 4
      %s29 = sphi 0, %s31
      %s32 = sphi 0, %s29
      %s33 = sphi 0, %s32
      %s49 = sphi 0, %s33
      %s53 = sphi 0, %s53
      %s55 = sphi 0, %s53
      %s56 = sphi 0, %s55
      %s70 = sphi 0, %s56
      %s74 = sphi 0, %s74
      %s76 = sphi 0, %s74
      %s77 = sphi 0, %s76
      %s91 = sphi 0, %s77
      %s95 = sphi 0, %s95
      %s97 = sphi 0, %s95
      %s98 = sphi 0, %s97
      %s112 = sphi 0, %s98
      %s116 = sphi 0, %s116
      %s118 = sphi 0, %s116
      %s119 = sphi 0, %s118
      %s133 = sphi 0, %s119
      %s139 = sphi 0, %s141
      %s142 = sphi 0, %s139
      %s143 = sphi 0, %s142
      %s159 = sphi 0, %s143
    $region4: #{tpu_custom_call.1} parent=1 // loop_header_branch
      %22 = sbr.rel (%p20) target = $region8
    $region5: #{tpu_custom_call.1} parent=1 // loop_body
      %s24 = ssub.s32 %s19, 1
      %s25 = ssub.s32 %s19, 2
      %s26 = sadd.s32 %s19, 1
      %s27 = ssub.s32 %s19, %s26
      %p28 = scmp.eq.s32.totalorder %s27, 0
      %s30 = sadd.s32 %s29, 1
      %s31 = scalar_select %p28, %s29, %s30
      %p34 = pneg %p28
      %p35 = scmp.eq.s32.totalorder %s19, 1
      %p36 = por %p34, %p35
      %p37 = scmp.ne.s32.totalorder %s29, %s32
      %p38 = scmp.eq.s32.totalorder %s19, 0
      %p39 = por %p37, %p38
      %p40 = scmp.ne.s32.totalorder %s29, %s32
      %p41 = scmp.eq.s32.totalorder %s24, 1
      %p42 = por %p40, %p41
      %p43 = scmp.ne.s32.totalorder %s32, %s33
      %p44 = scmp.eq.s32.totalorder %s24, 0
      %p45 = por %p43, %p44
      %p46 = scmp.ne.s32.totalorder %s32, %s33
      %p47 = scmp.eq.s32.totalorder %s25, 1
      %p48 = por %p46, %p47
      %p50 = scmp.ne.s32.totalorder %s33, %s49
      %p51 = scmp.eq.s32.totalorder %s25, 0
      %p52 = por %p50, %p51
      %s54 = sadd.s32 %s53, 1
      %p57 = scmp.eq.s32.totalorder %s19, 1
      %p58 = scmp.ne.s32.totalorder %s53, %s55
      %p59 = scmp.eq.s32.totalorder %s19, 0
      %p60 = por %p58, %p59
      %p61 = scmp.ne.s32.totalorder %s53, %s55
      %p62 = scmp.eq.s32.totalorder %s24, 1
      %p63 = por %p61, %p62
      %p64 = scmp.ne.s32.totalorder %s55, %s56
      %p65 = scmp.eq.s32.totalorder %s24, 0
      %p66 = por %p64, %p65
      %p67 = scmp.ne.s32.totalorder %s55, %s56
      %p68 = scmp.eq.s32.totalorder %s25, 1
      %p69 = por %p67, %p68
      %p71 = scmp.ne.s32.totalorder %s56, %s70
      %p72 = scmp.eq.s32.totalorder %s25, 0
      %p73 = por %p71, %p72
      %s75 = sadd.s32 %s74, 1
      %p78 = scmp.eq.s32.totalorder %s19, 1
      %p79 = scmp.ne.s32.totalorder %s74, %s76
      %p80 = scmp.eq.s32.totalorder %s19, 0
      %p81 = por %p79, %p80
      %p82 = scmp.ne.s32.totalorder %s74, %s76
      %p83 = scmp.eq.s32.totalorder %s24, 1
      %p84 = por %p82, %p83
      %p85 = scmp.ne.s32.totalorder %s76, %s77
      %p86 = scmp.eq.s32.totalorder %s24, 0
      %p87 = por %p85, %p86
      %p88 = scmp.ne.s32.totalorder %s76, %s77
      %p89 = scmp.eq.s32.totalorder %s25, 1
      %p90 = por %p88, %p89
      %p92 = scmp.ne.s32.totalorder %s77, %s91
      %p93 = scmp.eq.s32.totalorder %s25, 0
      %p94 = por %p92, %p93
      %s96 = sadd.s32 %s95, 1
      %p99 = scmp.eq.s32.totalorder %s19, 1
      %p100 = scmp.ne.s32.totalorder %s95, %s97
      %p101 = scmp.eq.s32.totalorder %s19, 0
      %p102 = por %p100, %p101
      %p103 = scmp.ne.s32.totalorder %s95, %s97
      %p104 = scmp.eq.s32.totalorder %s24, 1
      %p105 = por %p103, %p104
      %p106 = scmp.ne.s32.totalorder %s97, %s98
      %p107 = scmp.eq.s32.totalorder %s24, 0
      %p108 = por %p106, %p107
      %p109 = scmp.ne.s32.totalorder %s97, %s98
      %p110 = scmp.eq.s32.totalorder %s25, 1
      %p111 = por %p109, %p110
      %p113 = scmp.ne.s32.totalorder %s98, %s112
      %p114 = scmp.eq.s32.totalorder %s25, 0
      %p115 = por %p113, %p114
      %s117 = sadd.s32 %s116, 1
      %p120 = scmp.eq.s32.totalorder %s19, 1
      %p121 = scmp.ne.s32.totalorder %s116, %s118
      %p122 = scmp.eq.s32.totalorder %s19, 0
      %p123 = por %p121, %p122
      %p124 = scmp.ne.s32.totalorder %s116, %s118
      %p125 = scmp.eq.s32.totalorder %s24, 1
      %p126 = por %p124, %p125
      %p127 = scmp.ne.s32.totalorder %s118, %s119
      %p128 = scmp.eq.s32.totalorder %s24, 0
      %p129 = por %p127, %p128
      %p130 = scmp.ne.s32.totalorder %s118, %s119
      %p131 = scmp.eq.s32.totalorder %s25, 1
      %p132 = por %p130, %p131
      %p134 = scmp.ne.s32.totalorder %s119, %s133
      %p135 = scmp.eq.s32.totalorder %s25, 0
      %p136 = por %p134, %p135
      %s137 = ssub.s32 %s19, %s26
      %p138 = scmp.eq.s32.totalorder %s137, 0
      %s140 = sadd.s32 %s139, 1
      %s141 = scalar_select %p138, %s139, %s140
      %p144 = pneg %p138
      %p145 = scmp.eq.s32.totalorder %s19, 1
      %p146 = por %p144, %p145
      %p147 = scmp.ne.s32.totalorder %s139, %s142
      %p148 = scmp.eq.s32.totalorder %s19, 0
      %p149 = por %p147, %p148
      %p150 = scmp.ne.s32.totalorder %s139, %s142
      %p151 = scmp.eq.s32.totalorder %s24, 1
      %p152 = por %p150, %p151
      %p153 = scmp.ne.s32.totalorder %s142, %s143
      %p154 = scmp.eq.s32.totalorder %s24, 0
      %p155 = por %p153, %p154
      %p156 = scmp.ne.s32.totalorder %s142, %s143
      %p157 = scmp.eq.s32.totalorder %s25, 1
      %p158 = por %p156, %p157
      %p160 = scmp.ne.s32.totalorder %s143, %s159
      %p161 = scmp.eq.s32.totalorder %s25, 0
      %p162 = por %p160, %p161
      %p163 = scmp.le.s32.totalorder 1, %s19
      %p164 = scmp.lt.s32.totalorder %s19, 3
      %p165 = pnand %p163, %p164
      %p166 = pneg %p165
      // Predicated region
      $region9: #{tpu_custom_call.1} parent=5 // pred_check
        _
      $region10: #{tpu_custom_call.1} parent=5 // pred_check_branch
        %168 = sbr.rel (%p165) target = $region12
      $region11: #{tpu_custom_call.1} parent=5 // pred_region
        %s169 = ssub.s32 %s19, 1
        // Predicated region
        $region13: #{tpu_custom_call.1} parent=11 // pred_check
          %p170 = pneg %p66
        $region14: #{tpu_custom_call.1} parent=11 // pred_check_branch
          %172 = sbr.rel (%p170) target = $region16
        $region15: #{tpu_custom_call.1} parent=11 // pred_region
          %s174 = ssub.s32 64, 64
          %175 = vsyncadd [#allocation7], %s174
          %s177 = sshll.u32 [#allocation6], 4
          %s178 = int_to_ptr.vmem [resolvable:$true] %s177
          %180 = dma.hbm_to_vmem [thread:$0]  %s1, 64, %s178, [#allocation7]
        $region16: #{tpu_custom_call.1} parent=11 // pred_fallthru
          _
        // Predicated region
        $region17: #{tpu_custom_call.1} parent=11 // pred_check
          %p181 = pneg %p87
        $region18: #{tpu_custom_call.1} parent=11 // pred_check_branch
          %183 = sbr.rel (%p181) target = $region20
        $region19: #{tpu_custom_call.1} parent=11 // pred_region
          %s185 = ssub.s32 4096, 4096
          %186 = vsyncadd [#allocation7], %s185
          %s187 = sshll.u32 [#allocation8], 4
          %s188 = int_to_ptr.vmem [resolvable:$true] %s187
          %193 = dma.hbm_to_vmem [thread:$0]  %s2, 4096, %s188, [#allocation7], 256, 256, 16
        $region20: #{tpu_custom_call.1} parent=11 // pred_fallthru
          _
        // Predicated region
        $region21: #{tpu_custom_call.1} parent=11 // pred_check
          %p194 = pneg %p108
        $region22: #{tpu_custom_call.1} parent=11 // pred_check_branch
          %196 = sbr.rel (%p194) target = $region24
        $region23: #{tpu_custom_call.1} parent=11 // pred_region
          _
        $region24: #{tpu_custom_call.1} parent=11 // pred_fallthru
          _
        // Predicated region
        $region25: #{tpu_custom_call.1} parent=11 // pred_check
          %p197 = pneg %p129
        $region26: #{tpu_custom_call.1} parent=11 // pred_check_branch
          %199 = sbr.rel (%p197) target = $region28
        $region27: #{tpu_custom_call.1} parent=11 // pred_region
          %s201 = ssub.s32 4096, 4096
          %202 = vsyncadd [#allocation10], %s201
          %s203 = sshll.u32 [#allocation9], 4
          %s204 = int_to_ptr.vmem [resolvable:$true] %s203
          %209 = dma.hbm_to_vmem [thread:$0]  %s4, 4096, %s204, [#allocation10], 64, 64, 4
        $region28: #{tpu_custom_call.1} parent=11 // pred_fallthru
          _
      $region12: #{tpu_custom_call.1} parent=5 // pred_fallthru
        _
      %p210 = scmp.lt.s32.totalorder %s19, 2
      // Predicated region
      $region29: #{tpu_custom_call.1} parent=5 // pred_check
        %p211 = pneg %p210
      $region30: #{tpu_custom_call.1} parent=5 // pred_check_branch
        %213 = sbr.rel (%p211) target = $region32
      $region31: #{tpu_custom_call.1} parent=5 // pred_region
        // Predicated region
        $region33: #{tpu_custom_call.1} parent=31 // pred_check
          %p214 = pneg %p39
        $region34: #{tpu_custom_call.1} parent=31 // pred_check_branch
          %216 = sbr.rel (%p214) target = $region36
        $region35: #{tpu_custom_call.1} parent=31 // pred_region
          %s217 = sand.u32 %s29, 1
          %s218 = scalar_lea.sflag [#allocation4], %s217
          %s219 = sand.u32 %s29, 1
          %s220 = smul.addr %s219, 256
          %s221 = scalar_lea.vmem [#allocation3], %s220
          %s222 = smul.u32 32, %s19
          %s224 = ssub.s32 4096, 4096
          %225 = vsyncadd %s218, %s224
          %s226 = smul.addr %s222, 128
          %s227 = scalar_lea.hbm %s0, %s226
          %s228 = sshll.u32 %s221, 4
          %s229 = int_to_ptr.vmem [resolvable:$true] %s228
          %234 = dma.hbm_to_vmem [thread:$0]  %s227, 4096, %s229, %s218, 128, 128, 8
        $region36: #{tpu_custom_call.1} parent=31 // pred_fallthru
          _
      $region32: #{tpu_custom_call.1} parent=5 // pred_fallthru
        _
      %p235 = scmp.le.s32.totalorder 1, %s19
      %p236 = scmp.lt.s32.totalorder %s19, 3
      %p237 = pnand %p235, %p236
      %p238 = pneg %p237
      // Predicated region
      $region37: #{tpu_custom_call.1} parent=5 // pred_check
        _
      $region38: #{tpu_custom_call.1} parent=5 // pred_check_branch
        %240 = sbr.rel (%p237) target = $region40
      $region39: #{tpu_custom_call.1} parent=5 // pred_region
        %s241 = ssub.s32 %s19, 1
        %s242 = sand.u32 %s32, 1
        %s243 = scalar_lea.sflag [#allocation4], %s242
        %s244 = sand.u32 %s32, 1
        %s245 = smul.addr %s244, 256
        %s246 = scalar_lea.vmem [#allocation3], %s245
        // Predicated region
        $region41: #{tpu_custom_call.1} parent=39 // pred_check
          %p247 = pneg %p45
        $region42: #{tpu_custom_call.1} parent=39 // pred_check_branch
          %249 = sbr.rel (%p247) target = $region44
        $region43: #{tpu_custom_call.1} parent=39 // pred_region
          %250 = dma.done %s243, 4096
        $region44: #{tpu_custom_call.1} parent=39 // pred_fallthru
          _
        // Predicated region
        $region45: #{tpu_custom_call.1} parent=39 // pred_check
          %p251 = pneg %p66
        $region46: #{tpu_custom_call.1} parent=39 // pred_check_branch
          %253 = sbr.rel (%p251) target = $region48
        $region47: #{tpu_custom_call.1} parent=39 // pred_region
          %254 = dma.done [#allocation7], 64
        $region48: #{tpu_custom_call.1} parent=39 // pred_fallthru
          _
        // Predicated region
        $region49: #{tpu_custom_call.1} parent=39 // pred_check
          %p255 = pneg %p87
        $region50: #{tpu_custom_call.1} parent=39 // pred_check_branch
          %257 = sbr.rel (%p255) target = $region52
        $region51: #{tpu_custom_call.1} parent=39 // pred_region
          %258 = dma.done [#allocation7], 4096
        $region52: #{tpu_custom_call.1} parent=39 // pred_fallthru
          _
        // Predicated region
        $region53: #{tpu_custom_call.1} parent=39 // pred_check
          %p259 = pneg %p129
        $region54: #{tpu_custom_call.1} parent=39 // pred_check_branch
          %261 = sbr.rel (%p259) target = $region56
        $region55: #{tpu_custom_call.1} parent=39 // pred_region
          %262 = dma.done [#allocation10], 4096
        $region56: #{tpu_custom_call.1} parent=39 // pred_fallthru
          _
        %s263 = sand.u32 %s32, 1
        %s264 = scalar_lea.sflag [#allocation4], %s263
        %s265 = sand.u32 %s32, 1
        %s266 = smul.addr %s265, 256
        %s267 = scalar_lea.vmem [#allocation3], %s266
        %p268 = pneg %p45
        %p269 = pneg %p42
        %p270 = pneg %p66
        %p271 = pneg %p63
        %p272 = pneg %p87
        %p273 = pneg %p84
        %p274 = pneg %p108
        %p275 = pneg %p105
        %p276 = pneg %p129
        %p277 = pneg %p126
        %p278 = pneg %p155
        %p279 = pneg %p152
        %s280 = sand.u32 %s142, 1
        %s281 = scalar_lea.sflag [#allocation5], %s280
        %s282 = sand.u32 %s142, 1
        %s283 = smul.addr %s282, 256
        %s284 = scalar_lea.vmem [#allocation11], %s283
        %s285 = smul.u32 32, %s24
        %s286 = smul.u32 32, %s24
        %v288 = vld [vmem:[%s246] sm:$0xff]
        %v289 = vld [vmem:[%s246 + $0x8] sm:$0xff]
        %v290 = vld [vmem:[%s246 + $0x10] sm:$0xff]
        %v291 = vld [vmem:[%s246 + $0x18] sm:$0xff]
        %v292 = vld [vmem:[%s246 + $0x20] sm:$0xff]
        %v293 = vld [vmem:[%s246 + $0x28] sm:$0xff]
        %v294 = vld [vmem:[%s246 + $0x30] sm:$0xff]
        %v295 = vld [vmem:[%s246 + $0x38] sm:$0xff]
        %v296 = vld [vmem:[%s246 + $0x40] sm:$0xff]
        %v297 = vld [vmem:[%s246 + $0x48] sm:$0xff]
        %v298 = vld [vmem:[%s246 + $0x50] sm:$0xff]
        %v299 = vld [vmem:[%s246 + $0x58] sm:$0xff]
        %v300 = vld [vmem:[%s246 + $0x60] sm:$0xff]
        %v301 = vld [vmem:[%s246 + $0x68] sm:$0xff]
        %v302 = vld [vmem:[%s246 + $0x70] sm:$0xff]
        %v303 = vld [vmem:[%s246 + $0x78] sm:$0xff]
        %v304 = vld [vmem:[%s246 + $0x80] sm:$0xff]
        %v305 = vld [vmem:[%s246 + $0x88] sm:$0xff]
        %v306 = vld [vmem:[%s246 + $0x90] sm:$0xff]
        %v307 = vld [vmem:[%s246 + $0x98] sm:$0xff]
        %v308 = vld [vmem:[%s246 + $0xa0] sm:$0xff]
        %v309 = vld [vmem:[%s246 + $0xa8] sm:$0xff]
        %v310 = vld [vmem:[%s246 + $0xb0] sm:$0xff]
        %v311 = vld [vmem:[%s246 + $0xb8] sm:$0xff]
        %v312 = vld [vmem:[%s246 + $0xc0] sm:$0xff]
        %v313 = vld [vmem:[%s246 + $0xc8] sm:$0xff]
        %v314 = vld [vmem:[%s246 + $0xd0] sm:$0xff]
        %v315 = vld [vmem:[%s246 + $0xd8] sm:$0xff]
        %v316 = vld [vmem:[%s246 + $0xe0] sm:$0xff]
        %v317 = vld [vmem:[%s246 + $0xe8] sm:$0xff]
        %v318 = vld [vmem:[%s246 + $0xf0] sm:$0xff]
        %v319 = vld [vmem:[%s246 + $0xf8] sm:$0xff]
        %320 = vadd.xlane.f32.xlu0 %v288
        %v321 = vpop.xlane.xlu0 %320
        %322 = vadd.xlane.f32.xlu0 %v289
        %v323 = vpop.xlane.xlu0 %322
        %324 = vadd.xlane.f32.xlu0 %v290
        %v325 = vpop.xlane.xlu0 %324
        %326 = vadd.xlane.f32.xlu0 %v291
        %v327 = vpop.xlane.xlu0 %326
        %328 = vadd.xlane.f32.xlu0 %v292
        %v329 = vpop.xlane.xlu0 %328
        %330 = vadd.xlane.f32.xlu0 %v293
        %v331 = vpop.xlane.xlu0 %330
        %332 = vadd.xlane.f32.xlu0 %v294
        %v333 = vpop.xlane.xlu0 %332
        %334 = vadd.xlane.f32.xlu0 %v295
        %v335 = vpop.xlane.xlu0 %334
        %336 = vadd.xlane.f32.xlu0 %v296
        %v337 = vpop.xlane.xlu0 %336
        %338 = vadd.xlane.f32.xlu0 %v297
        %v339 = vpop.xlane.xlu0 %338
        %340 = vadd.xlane.f32.xlu0 %v298
        %v341 = vpop.xlane.xlu0 %340
        %342 = vadd.xlane.f32.xlu0 %v299
        %v343 = vpop.xlane.xlu0 %342
        %344 = vadd.xlane.f32.xlu0 %v300
        %v345 = vpop.xlane.xlu0 %344
        %346 = vadd.xlane.f32.xlu0 %v301
        %v347 = vpop.xlane.xlu0 %346
        %348 = vadd.xlane.f32.xlu0 %v302
        %v349 = vpop.xlane.xlu0 %348
        %350 = vadd.xlane.f32.xlu0 %v303
        %v351 = vpop.xlane.xlu0 %350
        %352 = vadd.xlane.f32.xlu0 %v304
        %v353 = vpop.xlane.xlu0 %352
        %354 = vadd.xlane.f32.xlu0 %v305
        %v355 = vpop.xlane.xlu0 %354
        %356 = vadd.xlane.f32.xlu0 %v306
        %v357 = vpop.xlane.xlu0 %356
        %358 = vadd.xlane.f32.xlu0 %v307
        %v359 = vpop.xlane.xlu0 %358
        %360 = vadd.xlane.f32.xlu0 %v308
        %v361 = vpop.xlane.xlu0 %360
        %362 = vadd.xlane.f32.xlu0 %v309
        %v363 = vpop.xlane.xlu0 %362
        %364 = vadd.xlane.f32.xlu0 %v310
        %v365 = vpop.xlane.xlu0 %364
        %366 = vadd.xlane.f32.xlu0 %v311
        %v367 = vpop.xlane.xlu0 %366
        %368 = vadd.xlane.f32.xlu0 %v312
        %v369 = vpop.xlane.xlu0 %368
        %370 = vadd.xlane.f32.xlu0 %v313
        %v371 = vpop.xlane.xlu0 %370
        %372 = vadd.xlane.f32.xlu0 %v314
        %v373 = vpop.xlane.xlu0 %372
        %374 = vadd.xlane.f32.xlu0 %v315
        %v375 = vpop.xlane.xlu0 %374
        %376 = vadd.xlane.f32.xlu0 %v316
        %v377 = vpop.xlane.xlu0 %376
        %378 = vadd.xlane.f32.xlu0 %v317
        %v379 = vpop.xlane.xlu0 %378
        %380 = vadd.xlane.f32.xlu0 %v318
        %v381 = vpop.xlane.xlu0 %380
        %382 = vadd.xlane.f32.xlu0 %v319
        %v383 = vpop.xlane.xlu0 %382
        %v384 = vrcp.pop 128.0
        %v385 = vmul.f32 %v321, %v384
        %v386 = vmul.f32 %v323, %v384
        %v387 = vmul.f32 %v325, %v384
        %v388 = vmul.f32 %v327, %v384
        %v389 = vmul.f32 %v329, %v384
        %v390 = vmul.f32 %v331, %v384
        %v391 = vmul.f32 %v333, %v384
        %v392 = vmul.f32 %v335, %v384
        %v393 = vmul.f32 %v337, %v384
        %v394 = vmul.f32 %v339, %v384
        %v395 = vmul.f32 %v341, %v384
        %v396 = vmul.f32 %v343, %v384
        %v397 = vmul.f32 %v345, %v384
        %v398 = vmul.f32 %v347, %v384
        %v399 = vmul.f32 %v349, %v384
        %v400 = vmul.f32 %v351, %v384
        %v401 = vmul.f32 %v353, %v384
        %v402 = vmul.f32 %v355, %v384
        %v403 = vmul.f32 %v357, %v384
        %v404 = vmul.f32 %v359, %v384
        %v405 = vmul.f32 %v361, %v384
        %v406 = vmul.f32 %v363, %v384
        %v407 = vmul.f32 %v365, %v384
        %v408 = vmul.f32 %v367, %v384
        %v409 = vmul.f32 %v369, %v384
        %v410 = vmul.f32 %v371, %v384
        %v411 = vmul.f32 %v373, %v384
        %v412 = vmul.f32 %v375, %v384
        %v413 = vmul.f32 %v377, %v384
        %v414 = vmul.f32 %v379, %v384
        %v415 = vmul.f32 %v381, %v384
        %v416 = vmul.f32 %v383, %v384
        %v417 = vsub.f32 %v288, %v385
        %v418 = vsub.f32 %v289, %v386
        %v419 = vsub.f32 %v290, %v387
        %v420 = vsub.f32 %v291, %v388
        %v421 = vsub.f32 %v292, %v389
        %v422 = vsub.f32 %v293, %v390
        %v423 = vsub.f32 %v294, %v391
        %v424 = vsub.f32 %v295, %v392
        %v425 = vsub.f32 %v296, %v393
        %v426 = vsub.f32 %v297, %v394
        %v427 = vsub.f32 %v298, %v395
        %v428 = vsub.f32 %v299, %v396
        %v429 = vsub.f32 %v300, %v397
        %v430 = vsub.f32 %v301, %v398
        %v431 = vsub.f32 %v302, %v399
        %v432 = vsub.f32 %v303, %v400
        %v433 = vsub.f32 %v304, %v401
        %v434 = vsub.f32 %v305, %v402
        %v435 = vsub.f32 %v306, %v403
        %v436 = vsub.f32 %v307, %v404
        %v437 = vsub.f32 %v308, %v405
        %v438 = vsub.f32 %v309, %v406
        %v439 = vsub.f32 %v310, %v407
        %v440 = vsub.f32 %v311, %v408
        %v441 = vsub.f32 %v312, %v409
        %v442 = vsub.f32 %v313, %v410
        %v443 = vsub.f32 %v314, %v411
        %v444 = vsub.f32 %v315, %v412
        %v445 = vsub.f32 %v316, %v413
        %v446 = vsub.f32 %v317, %v414
        %v447 = vsub.f32 %v318, %v415
        %v448 = vsub.f32 %v319, %v416
        %v449 = vmul.f32 %v417, %v417
        %v450 = vmul.f32 %v418, %v418
        %v451 = vmul.f32 %v419, %v419
        %v452 = vmul.f32 %v420, %v420
        %v453 = vmul.f32 %v421, %v421
        %v454 = vmul.f32 %v422, %v422
        %v455 = vmul.f32 %v423, %v423
        %v456 = vmul.f32 %v424, %v424
        %v457 = vmul.f32 %v425, %v425
        %v458 = vmul.f32 %v426, %v426
        %v459 = vmul.f32 %v427, %v427
        %v460 = vmul.f32 %v428, %v428
        %v461 = vmul.f32 %v429, %v429
        %v462 = vmul.f32 %v430, %v430
        %v463 = vmul.f32 %v431, %v431
        %v464 = vmul.f32 %v432, %v432
        %v465 = vmul.f32 %v433, %v433
        %v466 = vmul.f32 %v434, %v434
        %v467 = vmul.f32 %v435, %v435
        %v468 = vmul.f32 %v436, %v436
        %v469 = vmul.f32 %v437, %v437
        %v470 = vmul.f32 %v438, %v438
        %v471 = vmul.f32 %v439, %v439
        %v472 = vmul.f32 %v440, %v440
        %v473 = vmul.f32 %v441, %v441
        %v474 = vmul.f32 %v442, %v442
        %v475 = vmul.f32 %v443, %v443
        %v476 = vmul.f32 %v444, %v444
        %v477 = vmul.f32 %v445, %v445
        %v478 = vmul.f32 %v446, %v446
        %v479 = vmul.f32 %v447, %v447
        %v480 = vmul.f32 %v448, %v448
        %481 = vadd.xlane.f32.xlu0 %v449
        %v482 = vpop.xlane.xlu0 %481
        %483 = vadd.xlane.f32.xlu0 %v450
        %v484 = vpop.xlane.xlu0 %483
        %485 = vadd.xlane.f32.xlu0 %v451
        %v486 = vpop.xlane.xlu0 %485
        %487 = vadd.xlane.f32.xlu0 %v452
        %v488 = vpop.xlane.xlu0 %487
        %489 = vadd.xlane.f32.xlu0 %v453
        %v490 = vpop.xlane.xlu0 %489
        %491 = vadd.xlane.f32.xlu0 %v454
        %v492 = vpop.xlane.xlu0 %491
        %493 = vadd.xlane.f32.xlu0 %v455
        %v494 = vpop.xlane.xlu0 %493
        %495 = vadd.xlane.f32.xlu0 %v456
        %v496 = vpop.xlane.xlu0 %495
        %497 = vadd.xlane.f32.xlu0 %v457
        %v498 = vpop.xlane.xlu0 %497
        %499 = vadd.xlane.f32.xlu0 %v458
        %v500 = vpop.xlane.xlu0 %499
        %501 = vadd.xlane.f32.xlu0 %v459
        %v502 = vpop.xlane.xlu0 %501
        %503 = vadd.xlane.f32.xlu0 %v460
        %v504 = vpop.xlane.xlu0 %503
        %505 = vadd.xlane.f32.xlu0 %v461
        %v506 = vpop.xlane.xlu0 %505
        %507 = vadd.xlane.f32.xlu0 %v462
        %v508 = vpop.xlane.xlu0 %507
        %509 = vadd.xlane.f32.xlu0 %v463
        %v510 = vpop.xlane.xlu0 %509
        %511 = vadd.xlane.f32.xlu0 %v464
        %v512 = vpop.xlane.xlu0 %511
        %513 = vadd.xlane.f32.xlu0 %v465
        %v514 = vpop.xlane.xlu0 %513
        %515 = vadd.xlane.f32.xlu0 %v466
        %v516 = vpop.xlane.xlu0 %515
        %517 = vadd.xlane.f32.xlu0 %v467
        %v518 = vpop.xlane.xlu0 %517
        %519 = vadd.xlane.f32.xlu0 %v468
        %v520 = vpop.xlane.xlu0 %519
        %521 = vadd.xlane.f32.xlu0 %v469
        %v522 = vpop.xlane.xlu0 %521
        %523 = vadd.xlane.f32.xlu0 %v470
        %v524 = vpop.xlane.xlu0 %523
        %525 = vadd.xlane.f32.xlu0 %v471
        %v526 = vpop.xlane.xlu0 %525
        %527 = vadd.xlane.f32.xlu0 %v472
        %v528 = vpop.xlane.xlu0 %527
        %529 = vadd.xlane.f32.xlu0 %v473
        %v530 = vpop.xlane.xlu0 %529
        %531 = vadd.xlane.f32.xlu0 %v474
        %v532 = vpop.xlane.xlu0 %531
        %533 = vadd.xlane.f32.xlu0 %v475
        %v534 = vpop.xlane.xlu0 %533
        %535 = vadd.xlane.f32.xlu0 %v476
        %v536 = vpop.xlane.xlu0 %535
        %537 = vadd.xlane.f32.xlu0 %v477
        %v538 = vpop.xlane.xlu0 %537
        %539 = vadd.xlane.f32.xlu0 %v478
        %v540 = vpop.xlane.xlu0 %539
        %541 = vadd.xlane.f32.xlu0 %v479
        %v542 = vpop.xlane.xlu0 %541
        %543 = vadd.xlane.f32.xlu0 %v480
        %v544 = vpop.xlane.xlu0 %543
        %v545 = vmul.f32 %v482, %v384
        %v546 = vmul.f32 %v484, %v384
        %v547 = vmul.f32 %v486, %v384
        %v548 = vmul.f32 %v488, %v384
        %v549 = vmul.f32 %v490, %v384
        %v550 = vmul.f32 %v492, %v384
        %v551 = vmul.f32 %v494, %v384
        %v552 = vmul.f32 %v496, %v384
        %v553 = vmul.f32 %v498, %v384
        %v554 = vmul.f32 %v500, %v384
        %v555 = vmul.f32 %v502, %v384
        %v556 = vmul.f32 %v504, %v384
        %v557 = vmul.f32 %v506, %v384
        %v558 = vmul.f32 %v508, %v384
        %v559 = vmul.f32 %v510, %v384
        %v560 = vmul.f32 %v512, %v384
        %v561 = vmul.f32 %v514, %v384
        %v562 = vmul.f32 %v516, %v384
        %v563 = vmul.f32 %v518, %v384
        %v564 = vmul.f32 %v520, %v384
        %v565 = vmul.f32 %v522, %v384
        %v566 = vmul.f32 %v524, %v384
        %v567 = vmul.f32 %v526, %v384
        %v568 = vmul.f32 %v528, %v384
        %v569 = vmul.f32 %v530, %v384
        %v570 = vmul.f32 %v532, %v384
        %v571 = vmul.f32 %v534, %v384
        %v572 = vmul.f32 %v536, %v384
        %v573 = vmul.f32 %v538, %v384
        %v574 = vmul.f32 %v540, %v384
        %v575 = vmul.f32 %v542, %v384
        %v576 = vmul.f32 %v544, %v384
        %v577 = vadd.f32 %v545, 1e-05
        %v578 = vadd.f32 %v546, 1e-05
        %v579 = vadd.f32 %v547, 1e-05
        %v580 = vadd.f32 %v548, 1e-05
        %v581 = vadd.f32 %v549, 1e-05
        %v582 = vadd.f32 %v550, 1e-05
        %v583 = vadd.f32 %v551, 1e-05
        %v584 = vadd.f32 %v552, 1e-05
        %v585 = vadd.f32 %v553, 1e-05
        %v586 = vadd.f32 %v554, 1e-05
        %v587 = vadd.f32 %v555, 1e-05
        %v588 = vadd.f32 %v556, 1e-05
        %v589 = vadd.f32 %v557, 1e-05
        %v590 = vadd.f32 %v558, 1e-05
        %v591 = vadd.f32 %v559, 1e-05
        %v592 = vadd.f32 %v560, 1e-05
        %v593 = vadd.f32 %v561, 1e-05
        %v594 = vadd.f32 %v562, 1e-05
        %v595 = vadd.f32 %v563, 1e-05
        %v596 = vadd.f32 %v564, 1e-05
        %v597 = vadd.f32 %v565, 1e-05
        %v598 = vadd.f32 %v566, 1e-05
        %v599 = vadd.f32 %v567, 1e-05
        %v600 = vadd.f32 %v568, 1e-05
        %v601 = vadd.f32 %v569, 1e-05
        %v602 = vadd.f32 %v570, 1e-05
        %v603 = vadd.f32 %v571, 1e-05
        %v604 = vadd.f32 %v572, 1e-05
        %v605 = vadd.f32 %v573, 1e-05
        %v606 = vadd.f32 %v574, 1e-05
        %v607 = vadd.f32 %v575, 1e-05
        %v608 = vadd.f32 %v576, 1e-05
        %v609 = vrsqrt.pop %v577
        %v610 = vrsqrt.pop %v578
        %v611 = vrsqrt.pop %v579
        %v612 = vrsqrt.pop %v580
        %v613 = vrsqrt.pop %v581
        %v614 = vrsqrt.pop %v582
        %v615 = vrsqrt.pop %v583
        %v616 = vrsqrt.pop %v584
        %v617 = vrsqrt.pop %v585
        %v618 = vrsqrt.pop %v586
        %v619 = vrsqrt.pop %v587
        %v620 = vrsqrt.pop %v588
        %v621 = vrsqrt.pop %v589
        %v622 = vrsqrt.pop %v590
        %v623 = vrsqrt.pop %v591
        %v624 = vrsqrt.pop %v592
        %v625 = vrsqrt.pop %v593
        %v626 = vrsqrt.pop %v594
        %v627 = vrsqrt.pop %v595
        %v628 = vrsqrt.pop %v596
        %v629 = vrsqrt.pop %v597
        %v630 = vrsqrt.pop %v598
        %v631 = vrsqrt.pop %v599
        %v632 = vrsqrt.pop %v600
        %v633 = vrsqrt.pop %v601
        %v634 = vrsqrt.pop %v602
        %v635 = vrsqrt.pop %v603
        %v636 = vrsqrt.pop %v604
        %v637 = vrsqrt.pop %v605
        %v638 = vrsqrt.pop %v606
        %v639 = vrsqrt.pop %v607
        %v640 = vrsqrt.pop %v608
        %v641 = vmul.f32 %v417, %v609
        %v642 = vmul.f32 %v418, %v610
        %v643 = vmul.f32 %v419, %v611
        %v644 = vmul.f32 %v420, %v612
        %v645 = vmul.f32 %v421, %v613
        %v646 = vmul.f32 %v422, %v614
        %v647 = vmul.f32 %v423, %v615
        %v648 = vmul.f32 %v424, %v616
        %v649 = vmul.f32 %v425, %v617
        %v650 = vmul.f32 %v426, %v618
        %v651 = vmul.f32 %v427, %v619
        %v652 = vmul.f32 %v428, %v620
        %v653 = vmul.f32 %v429, %v621
        %v654 = vmul.f32 %v430, %v622
        %v655 = vmul.f32 %v431, %v623
        %v656 = vmul.f32 %v432, %v624
        %v657 = vmul.f32 %v433, %v625
        %v658 = vmul.f32 %v434, %v626
        %v659 = vmul.f32 %v435, %v627
        %v660 = vmul.f32 %v436, %v628
        %v661 = vmul.f32 %v437, %v629
        %v662 = vmul.f32 %v438, %v630
        %v663 = vmul.f32 %v439, %v631
        %v664 = vmul.f32 %v440, %v632
        %v665 = vmul.f32 %v441, %v633
        %v666 = vmul.f32 %v442, %v634
        %v667 = vmul.f32 %v443, %v635
        %v668 = vmul.f32 %v444, %v636
        %v669 = vmul.f32 %v445, %v637
        %v670 = vmul.f32 %v446, %v638
        %v671 = vmul.f32 %v447, %v639
        %v672 = vmul.f32 %v448, %v640
        %v673 = vld [vmem:[#allocation6] sm:$0x1]
        %v674 = vlaneseq
        %v675 = vshrl.u32 %v674, 7
        %v676 = vsub.s32 0, %v675
        %v677 = vrot.slane %v673, %v676
        %v678 = vmul.f32 %v641, %v677
        %v679 = vmul.f32 %v642, %v677
        %v680 = vmul.f32 %v643, %v677
        %v681 = vmul.f32 %v644, %v677
        %v682 = vmul.f32 %v645, %v677
        %v683 = vmul.f32 %v646, %v677
        %v684 = vmul.f32 %v647, %v677
        %v685 = vmul.f32 %v648, %v677
        %v686 = vmul.f32 %v649, %v677
        %v687 = vmul.f32 %v650, %v677
        %v688 = vmul.f32 %v651, %v677
        %v689 = vmul.f32 %v652, %v677
        %v690 = vmul.f32 %v653, %v677
        %v691 = vmul.f32 %v654, %v677
        %v692 = vmul.f32 %v655, %v677
        %v693 = vmul.f32 %v656, %v677
        %v694 = vmul.f32 %v657, %v677
        %v695 = vmul.f32 %v658, %v677
        %v696 = vmul.f32 %v659, %v677
        %v697 = vmul.f32 %v660, %v677
        %v698 = vmul.f32 %v661, %v677
        %v699 = vmul.f32 %v662, %v677
        %v700 = vmul.f32 %v663, %v677
        %v701 = vmul.f32 %v664, %v677
        %v702 = vmul.f32 %v665, %v677
        %v703 = vmul.f32 %v666, %v677
        %v704 = vmul.f32 %v667, %v677
        %v705 = vmul.f32 %v668, %v677
        %v706 = vmul.f32 %v669, %v677
        %v707 = vmul.f32 %v670, %v677
        %v708 = vmul.f32 %v671, %v677
        %v709 = vmul.f32 %v672, %v677
        %v710 = vld [vmem:[#allocation6 + $0x1] sm:$0x1]
        %v711 = vlaneseq
        %v712 = vshrl.u32 %v711, 7
        %v713 = vsub.s32 0, %v712
        %v714 = vrot.slane %v710, %v713
        %v715 = vadd.f32 %v678, %v714
        %v716 = vadd.f32 %v679, %v714
        %v717 = vadd.f32 %v680, %v714
        %v718 = vadd.f32 %v681, %v714
        %v719 = vadd.f32 %v682, %v714
        %v720 = vadd.f32 %v683, %v714
        %v721 = vadd.f32 %v684, %v714
        %v722 = vadd.f32 %v685, %v714
        %v723 = vadd.f32 %v686, %v714
        %v724 = vadd.f32 %v687, %v714
        %v725 = vadd.f32 %v688, %v714
        %v726 = vadd.f32 %v689, %v714
        %v727 = vadd.f32 %v690, %v714
        %v728 = vadd.f32 %v691, %v714
        %v729 = vadd.f32 %v692, %v714
        %v730 = vadd.f32 %v693, %v714
        %v731 = vadd.f32 %v694, %v714
        %v732 = vadd.f32 %v695, %v714
        %v733 = vadd.f32 %v696, %v714
        %v734 = vadd.f32 %v697, %v714
        %v735 = vadd.f32 %v698, %v714
        %v736 = vadd.f32 %v699, %v714
        %v737 = vadd.f32 %v700, %v714
        %v738 = vadd.f32 %v701, %v714
        %v739 = vadd.f32 %v702, %v714
        %v740 = vadd.f32 %v703, %v714
        %v741 = vadd.f32 %v704, %v714
        %v742 = vadd.f32 %v705, %v714
        %v743 = vadd.f32 %v706, %v714
        %v744 = vadd.f32 %v707, %v714
        %v745 = vadd.f32 %v708, %v714
        %v746 = vadd.f32 %v709, %v714
        %v747 = vpack.c.bf16 %v716, %v715
        %v748 = vpack.c.bf16 %v718, %v717
        %v749 = vpack.c.bf16 %v720, %v719
        %v750 = vpack.c.bf16 %v722, %v721
        %v751 = vpack.c.bf16 %v724, %v723
        %v752 = vpack.c.bf16 %v726, %v725
        %v753 = vpack.c.bf16 %v728, %v727
        %v754 = vpack.c.bf16 %v730, %v729
        %v755 = vpack.c.bf16 %v732, %v731
        %v756 = vpack.c.bf16 %v734, %v733
        %v757 = vpack.c.bf16 %v736, %v735
        %v758 = vpack.c.bf16 %v738, %v737
        %v759 = vpack.c.bf16 %v740, %v739
        %v760 = vpack.c.bf16 %v742, %v741
        %v761 = vpack.c.bf16 %v744, %v743
        %v762 = vpack.c.bf16 %v746, %v745
        %v763 = vld [vmem:[#allocation8] sm:$0xff]
        %v764 = vld [vmem:[#allocation8 + $0x8] sm:$0xff]
        %v765 = vld [vmem:[#allocation8 + $0x10] sm:$0xff]
        %v766 = vld [vmem:[#allocation8 + $0x18] sm:$0xff]
        %v767 = vld [vmem:[#allocation8 + $0x20] sm:$0xff]
        %v768 = vld [vmem:[#allocation8 + $0x28] sm:$0xff]
        %v769 = vld [vmem:[#allocation8 + $0x30] sm:$0xff]
        %v770 = vld [vmem:[#allocation8 + $0x38] sm:$0xff]
        %v771 = vld [vmem:[#allocation8 + $0x40] sm:$0xff]
        %v772 = vld [vmem:[#allocation8 + $0x48] sm:$0xff]
        %v773 = vld [vmem:[#allocation8 + $0x50] sm:$0xff]
        %v774 = vld [vmem:[#allocation8 + $0x58] sm:$0xff]
        %v775 = vld [vmem:[#allocation8 + $0x60] sm:$0xff]
        %v776 = vld [vmem:[#allocation8 + $0x68] sm:$0xff]
        %v777 = vld [vmem:[#allocation8 + $0x70] sm:$0xff]
        %v778 = vld [vmem:[#allocation8 + $0x78] sm:$0xff]
        %v779 = vld [vmem:[#allocation8 + $0x80] sm:$0xff]
        %v780 = vld [vmem:[#allocation8 + $0x88] sm:$0xff]
        %v781 = vld [vmem:[#allocation8 + $0x90] sm:$0xff]
        %v782 = vld [vmem:[#allocation8 + $0x98] sm:$0xff]
        %v783 = vld [vmem:[#allocation8 + $0xa0] sm:$0xff]
        %v784 = vld [vmem:[#allocation8 + $0xa8] sm:$0xff]
        %v785 = vld [vmem:[#allocation8 + $0xb0] sm:$0xff]
        %v786 = vld [vmem:[#allocation8 + $0xb8] sm:$0xff]
        %v787 = vld [vmem:[#allocation8 + $0xc0] sm:$0xff]
        %v788 = vld [vmem:[#allocation8 + $0xc8] sm:$0xff]
        %v789 = vld [vmem:[#allocation8 + $0xd0] sm:$0xff]
        %v790 = vld [vmem:[#allocation8 + $0xd8] sm:$0xff]
        %v791 = vld [vmem:[#allocation8 + $0xe0] sm:$0xff]
        %v792 = vld [vmem:[#allocation8 + $0xe8] sm:$0xff]
        %v793 = vld [vmem:[#allocation8 + $0xf0] sm:$0xff]
        %v794 = vld [vmem:[#allocation8 + $0xf8] sm:$0xff]
        %v795 = vld [vmem:[%s3] sm:$0xf]
        %v797 = vlaneseq
        %v798 = vshrl.u32 %v797, 7
        %v799 = vsub.s32 0, %v798
        %v800 = vrot.slane %v795, %v799
        %v801 = vlaneseq
        %v802 = vshrl.u32 %v801, 7
        %v803 = vsub.s32 1, %v802
        %v804 = vrot.slane %v795, %v803
        %v805 = vlaneseq
        %v806 = vshrl.u32 %v805, 7
        %v807 = vsub.s32 2, %v806
        %v808 = vrot.slane %v795, %v807
        %v809 = vlaneseq
        %v810 = vshrl.u32 %v809, 7
        %v811 = vsub.s32 3, %v810
        %v812 = vrot.slane %v795, %v811
        %v849 = vunpack.c.l.b16 %v763
        %v850 = vunpack.c.h.b16 %v763
        %v851 = vunpack.c.l.b16 %v764
        %v852 = vunpack.c.h.b16 %v764
        %v853 = vunpack.c.l.b16 %v765
        %v854 = vunpack.c.h.b16 %v765
        %v855 = vunpack.c.l.b16 %v766
        %v856 = vunpack.c.h.b16 %v766
        %v857 = vunpack.c.l.b16 %v767
        %v858 = vunpack.c.h.b16 %v767
        %v859 = vunpack.c.l.b16 %v768
        %v860 = vunpack.c.h.b16 %v768
        %v861 = vunpack.c.l.b16 %v769
        %v862 = vunpack.c.h.b16 %v769
        %v863 = vunpack.c.l.b16 %v770
        %v864 = vunpack.c.h.b16 %v770
        %v865 = vunpack.c.l.b16 %v771
        %v866 = vunpack.c.h.b16 %v771
        %v867 = vunpack.c.l.b16 %v772
        %v868 = vunpack.c.h.b16 %v772
        %v869 = vunpack.c.l.b16 %v773
        %v870 = vunpack.c.h.b16 %v773
        %v871 = vunpack.c.l.b16 %v774
        %v872 = vunpack.c.h.b16 %v774
        %v873 = vunpack.c.l.b16 %v775
        %v874 = vunpack.c.h.b16 %v775
        %v875 = vunpack.c.l.b16 %v776
        %v876 = vunpack.c.h.b16 %v776
        %v877 = vunpack.c.l.b16 %v777
        %v878 = vunpack.c.h.b16 %v777
        %v879 = vunpack.c.l.b16 %v778
        %v880 = vunpack.c.h.b16 %v778
        %v881 = vunpack.c.l.b16 %v779
        %v882 = vunpack.c.h.b16 %v779
        %v883 = vunpack.c.l.b16 %v780
        %v884 = vunpack.c.h.b16 %v780
        %v885 = vunpack.c.l.b16 %v781
        %v886 = vunpack.c.h.b16 %v781
        %v887 = vunpack.c.l.b16 %v782
        %v888 = vunpack.c.h.b16 %v782
        %v889 = vunpack.c.l.b16 %v783
        %v890 = vunpack.c.h.b16 %v783
        %v891 = vunpack.c.l.b16 %v784
        %v892 = vunpack.c.h.b16 %v784
        %v893 = vunpack.c.l.b16 %v785
        %v894 = vunpack.c.h.b16 %v785
        %v895 = vunpack.c.l.b16 %v786
        %v896 = vunpack.c.h.b16 %v786
        %v897 = vunpack.c.l.b16 %v787
        %v898 = vunpack.c.h.b16 %v787
        %v899 = vunpack.c.l.b16 %v788
        %v900 = vunpack.c.h.b16 %v788
        %v901 = vunpack.c.l.b16 %v789
        %v902 = vunpack.c.h.b16 %v789
        %v903 = vunpack.c.l.b16 %v790
        %v904 = vunpack.c.h.b16 %v790
        %v905 = vunpack.c.l.b16 %v791
        %v906 = vunpack.c.h.b16 %v791
        %v907 = vunpack.c.l.b16 %v792
        %v908 = vunpack.c.h.b16 %v792
        %v909 = vunpack.c.l.b16 %v793
        %v910 = vunpack.c.h.b16 %v793
        %v911 = vunpack.c.l.b16 %v794
        %v912 = vunpack.c.h.b16 %v794
        %v913 = vpack.c.b16 %v853, %v849
        %v914 = vpack.c.b16 %v854, %v850
        %v915 = vpack.c.b16 %v855, %v851
        %v916 = vpack.c.b16 %v856, %v852
        %v917 = vpack.c.b16 %v861, %v857
        %v918 = vpack.c.b16 %v862, %v858
        %v919 = vpack.c.b16 %v863, %v859
        %v920 = vpack.c.b16 %v864, %v860
        %v921 = vpack.c.b16 %v869, %v865
        %v922 = vpack.c.b16 %v870, %v866
        %v923 = vpack.c.b16 %v871, %v867
        %v924 = vpack.c.b16 %v872, %v868
        %v925 = vpack.c.b16 %v877, %v873
        %v926 = vpack.c.b16 %v878, %v874
        %v927 = vpack.c.b16 %v879, %v875
        %v928 = vpack.c.b16 %v880, %v876
        %v929 = vpack.c.b16 %v885, %v881
        %v930 = vpack.c.b16 %v886, %v882
        %v931 = vpack.c.b16 %v887, %v883
        %v932 = vpack.c.b16 %v888, %v884
        %v933 = vpack.c.b16 %v893, %v889
        %v934 = vpack.c.b16 %v894, %v890
        %v935 = vpack.c.b16 %v895, %v891
        %v936 = vpack.c.b16 %v896, %v892
        %v937 = vpack.c.b16 %v901, %v897
        %v938 = vpack.c.b16 %v902, %v898
        %v939 = vpack.c.b16 %v903, %v899
        %v940 = vpack.c.b16 %v904, %v900
        %v941 = vpack.c.b16 %v909, %v905
        %v942 = vpack.c.b16 %v910, %v906
        %v943 = vpack.c.b16 %v911, %v907
        %v944 = vpack.c.b16 %v912, %v908
        %977 = vmatprep.subr.bf16.mxu0 %v914
        %978 = vmatpush1.bf16.msra.mxu0 %v913
        %979 = vmatprep.subr.bf16.mxu0 %v918
        %980 = vmatpush1.bf16.msra.mxu0 %v917
        %981 = vmatprep.subr.bf16.mxu0 %v922
        %982 = vmatpush1.bf16.msra.mxu0 %v921
        %983 = vmatprep.subr.bf16.mxu0 %v926
        %984 = vmatpush1.bf16.msra.mxu0 %v925
        %985 = vmatprep.subr.bf16.mxu0 %v930
        %986 = vmatpush1.bf16.msra.mxu0 %v929
        %987 = vmatprep.subr.bf16.mxu0 %v934
        %988 = vmatpush1.bf16.msra.mxu0 %v933
        %989 = vmatprep.subr.bf16.mxu0 %v938
        %990 = vmatpush1.bf16.msra.mxu0 %v937
        %991 = vmatprep.subr.bf16.mxu0 %v942
        %992 = vmatpush1.bf16.msra.mxu0 %v941
        %993 = vmatprep.subr.bf16.mxu0 0
        %994 = vmatpush1.bf16.msra.mxu0 0
        %995 = vmatprep.subr.bf16.mxu0 0
        %996 = vmatpush1.bf16.msra.mxu0 0
        %997 = vmatprep.subr.bf16.mxu0 0
        %998 = vmatpush1.bf16.msra.mxu0 0
        %999 = vmatprep.subr.bf16.mxu0 0
        %1000 = vmatpush1.bf16.msra.mxu0 0
        %1001 = vmatprep.subr.bf16.mxu0 0
        %1002 = vmatpush1.bf16.msra.mxu0 0
        %1003 = vmatprep.subr.bf16.mxu0 0
        %1004 = vmatpush1.bf16.msra.mxu0 0
        %1005 = vmatprep.subr.bf16.mxu0 0
        %1006 = vmatpush1.bf16.msra.mxu0 0
        %1007 = vmatprep.subr.bf16.mxu0 0
        %1008 = vmatpush1.bf16.msra.mxu0 0
        %1009 = vmatprep.mubr.bf16.mxu0 0
        %1010 = vmatmul.mubr.bf16.gmra.mrb[0].mxu0 %v747
        %v1011 = vpop.f32.mrb[0].mxu0
        %v1012 = vadd.f32 %v800, %v1011
        %v1013 = vpop.f32.mrb[0].mxu0
        %v1014 = vadd.f32 %v804, %v1013
        %v1015 = vpop.f32.mrb[0].mxu0
        %v1016 = vadd.f32 %v800, %v1015
        %v1017 = vpop.f32.mrb[0].mxu0
        %v1018 = vadd.f32 %v804, %v1017
        %1019 = vmatprep.mubr.bf16.mxu0 0
        %1020 = vmatmul.mubr.bf16.gmra.mrb[0].mxu0 %v748
        %v1021 = vpop.f32.mrb[0].mxu0
        %v1022 = vadd.f32 %v800, %v1021
        %v1023 = vpop.f32.mrb[0].mxu0
        %v1024 = vadd.f32 %v804, %v1023
        %v1025 = vpop.f32.mrb[0].mxu0
        %v1026 = vadd.f32 %v800, %v1025
        %v1027 = vpop.f32.mrb[0].mxu0
        %v1028 = vadd.f32 %v804, %v1027
        %1029 = vmatprep.mubr.bf16.mxu0 0
        %1030 = vmatmul.mubr.bf16.gmra.mrb[0].mxu0 %v749
        %v1031 = vpop.f32.mrb[0].mxu0
        %v1032 = vadd.f32 %v800, %v1031
        %v1033 = vpop.f32.mrb[0].mxu0
        %v1034 = vadd.f32 %v804, %v1033
        %v1035 = vpop.f32.mrb[0].mxu0
        %v1036 = vadd.f32 %v800, %v1035
        %v1037 = vpop.f32.mrb[0].mxu0
        %v1038 = vadd.f32 %v804, %v1037
        %1039 = vmatprep.mubr.bf16.mxu0 0
        %1040 = vmatmul.mubr.bf16.gmra.mrb[0].mxu0 %v750
        %v1041 = vpop.f32.mrb[0].mxu0
        %v1042 = vadd.f32 %v800, %v1041
        %v1043 = vpop.f32.mrb[0].mxu0
        %v1044 = vadd.f32 %v804, %v1043
        %v1045 = vpop.f32.mrb[0].mxu0
        %v1046 = vadd.f32 %v800, %v1045
        %v1047 = vpop.f32.mrb[0].mxu0
        %v1048 = vadd.f32 %v804, %v1047
        %1049 = vmatprep.mubr.bf16.mxu0 0
        %1050 = vmatmul.mubr.bf16.gmra.mrb[0].mxu0 %v751
        %v1051 = vpop.f32.mrb[0].mxu0
        %v1052 = vadd.f32 %v800, %v1051
        %v1053 = vpop.f32.mrb[0].mxu0
        %v1054 = vadd.f32 %v804, %v1053
        %v1055 = vpop.f32.mrb[0].mxu0
        %v1056 = vadd.f32 %v800, %v1055
        %v1057 = vpop.f32.mrb[0].mxu0
        %v1058 = vadd.f32 %v804, %v1057
        %1059 = vmatprep.mubr.bf16.mxu0 0
        %1060 = vmatmul.mubr.bf16.gmra.mrb[0].mxu0 %v752
        %v1061 = vpop.f32.mrb[0].mxu0
        %v1062 = vadd.f32 %v800, %v1061
        %v1063 = vpop.f32.mrb[0].mxu0
        %v1064 = vadd.f32 %v804, %v1063
        %v1065 = vpop.f32.mrb[0].mxu0
        %v1066 = vadd.f32 %v800, %v1065
        %v1067 = vpop.f32.mrb[0].mxu0
        %v1068 = vadd.f32 %v804, %v1067
        %1069 = vmatprep.mubr.bf16.mxu0 0
        %1070 = vmatmul.mubr.bf16.gmra.mrb[0].mxu0 %v753
        %v1071 = vpop.f32.mrb[0].mxu0
        %v1072 = vadd.f32 %v800, %v1071
        %v1073 = vpop.f32.mrb[0].mxu0
        %v1074 = vadd.f32 %v804, %v1073
        %v1075 = vpop.f32.mrb[0].mxu0
        %v1076 = vadd.f32 %v800, %v1075
        %v1077 = vpop.f32.mrb[0].mxu0
        %v1078 = vadd.f32 %v804, %v1077
        %1079 = vmatprep.mubr.bf16.mxu0 0
        %1080 = vmatmul.mubr.bf16.gmra.mrb[0].mxu0 %v754
        %v1081 = vpop.f32.mrb[0].mxu0
        %v1082 = vadd.f32 %v800, %v1081
        %v1083 = vpop.f32.mrb[0].mxu0
        %v1084 = vadd.f32 %v804, %v1083
        %v1085 = vpop.f32.mrb[0].mxu0
        %v1086 = vadd.f32 %v800, %v1085
        %v1087 = vpop.f32.mrb[0].mxu0
        %v1088 = vadd.f32 %v804, %v1087
        %1089 = vmatprep.mubr.bf16.mxu0 0
        %1090 = vmatmul.mubr.bf16.gmra.mrb[0].mxu0 %v755
        %v1091 = vpop.f32.mrb[0].mxu0
        %v1092 = vadd.f32 %v800, %v1091
        %v1093 = vpop.f32.mrb[0].mxu0
        %v1094 = vadd.f32 %v804, %v1093
        %v1095 = vpop.f32.mrb[0].mxu0
        %v1096 = vadd.f32 %v800, %v1095
        %v1097 = vpop.f32.mrb[0].mxu0
        %v1098 = vadd.f32 %v804, %v1097
        %1099 = vmatprep.mubr.bf16.mxu0 0
        %1100 = vmatmul.mubr.bf16.gmra.mrb[0].mxu0 %v756
        %v1101 = vpop.f32.mrb[0].mxu0
        %v1102 = vadd.f32 %v800, %v1101
        %v1103 = vpop.f32.mrb[0].mxu0
        %v1104 = vadd.f32 %v804, %v1103
        %v1105 = vpop.f32.mrb[0].mxu0
        %v1106 = vadd.f32 %v800, %v1105
        %v1107 = vpop.f32.mrb[0].mxu0
        %v1108 = vadd.f32 %v804, %v1107
        %1109 = vmatprep.mubr.bf16.mxu0 0
        %1110 = vmatmul.mubr.bf16.gmra.mrb[0].mxu0 %v757
        %v1111 = vpop.f32.mrb[0].mxu0
        %v1112 = vadd.f32 %v800, %v1111
        %v1113 = vpop.f32.mrb[0].mxu0
        %v1114 = vadd.f32 %v804, %v1113
        %v1115 = vpop.f32.mrb[0].mxu0
        %v1116 = vadd.f32 %v800, %v1115
        %v1117 = vpop.f32.mrb[0].mxu0
        %v1118 = vadd.f32 %v804, %v1117
        %1119 = vmatprep.mubr.bf16.mxu0 0
        %1120 = vmatmul.mubr.bf16.gmra.mrb[0].mxu0 %v758
        %v1121 = vpop.f32.mrb[0].mxu0
        %v1122 = vadd.f32 %v800, %v1121
        %v1123 = vpop.f32.mrb[0].mxu0
        %v1124 = vadd.f32 %v804, %v1123
        %v1125 = vpop.f32.mrb[0].mxu0
        %v1126 = vadd.f32 %v800, %v1125
        %v1127 = vpop.f32.mrb[0].mxu0
        %v1128 = vadd.f32 %v804, %v1127
        %1129 = vmatprep.mubr.bf16.mxu0 0
        %1130 = vmatmul.mubr.bf16.gmra.mrb[0].mxu0 %v759
        %v1131 = vpop.f32.mrb[0].mxu0
        %v1132 = vadd.f32 %v800, %v1131
        %v1133 = vpop.f32.mrb[0].mxu0
        %v1134 = vadd.f32 %v804, %v1133
        %v1135 = vpop.f32.mrb[0].mxu0
        %v1136 = vadd.f32 %v800, %v1135
        %v1137 = vpop.f32.mrb[0].mxu0
        %v1138 = vadd.f32 %v804, %v1137
        %1139 = vmatprep.mubr.bf16.mxu0 0
        %1140 = vmatmul.mubr.bf16.gmra.mrb[0].mxu0 %v760
        %v1141 = vpop.f32.mrb[0].mxu0
        %v1142 = vadd.f32 %v800, %v1141
        %v1143 = vpop.f32.mrb[0].mxu0
        %v1144 = vadd.f32 %v804, %v1143
        %v1145 = vpop.f32.mrb[0].mxu0
        %v1146 = vadd.f32 %v800, %v1145
        %v1147 = vpop.f32.mrb[0].mxu0
        %v1148 = vadd.f32 %v804, %v1147
        %1149 = vmatprep.mubr.bf16.mxu0 0
        %1150 = vmatmul.mubr.bf16.gmra.mrb[0].mxu0 %v761
        %v1151 = vpop.f32.mrb[0].mxu0
        %v1152 = vadd.f32 %v800, %v1151
        %v1153 = vpop.f32.mrb[0].mxu0
        %v1154 = vadd.f32 %v804, %v1153
        %v1155 = vpop.f32.mrb[0].mxu0
        %v1156 = vadd.f32 %v800, %v1155
        %v1157 = vpop.f32.mrb[0].mxu0
        %v1158 = vadd.f32 %v804, %v1157
        %1159 = vmatprep.mubr.bf16.mxu0 0
        %1160 = vmatmul.mubr.bf16.gmra.mrb[0].mxu0 %v762
        %v1161 = vpop.f32.mrb[0].mxu0
        %v1162 = vadd.f32 %v800, %v1161
        %v1163 = vpop.f32.mrb[0].mxu0
        %v1164 = vadd.f32 %v804, %v1163
        %v1165 = vpop.f32.mrb[0].mxu0
        %v1166 = vadd.f32 %v800, %v1165
        %v1167 = vpop.f32.mrb[0].mxu0
        %v1168 = vadd.f32 %v804, %v1167
        %1169 = vdwg.mxu0
        %1170 = vmatprep.subr.bf16.mxu0 %v916
        %1171 = vmatpush1.bf16.msra.mxu0 %v915
        %1172 = vmatprep.subr.bf16.mxu0 %v920
        %1173 = vmatpush1.bf16.msra.mxu0 %v919
        %1174 = vmatprep.subr.bf16.mxu0 %v924
        %1175 = vmatpush1.bf16.msra.mxu0 %v923
        %1176 = vmatprep.subr.bf16.mxu0 %v928
        %1177 = vmatpush1.bf16.msra.mxu0 %v927
        %1178 = vmatprep.subr.bf16.mxu0 %v932
        %1179 = vmatpush1.bf16.msra.mxu0 %v931
        %1180 = vmatprep.subr.bf16.mxu0 %v936
        %1181 = vmatpush1.bf16.msra.mxu0 %v935
        %1182 = vmatprep.subr.bf16.mxu0 %v940
        %1183 = vmatpush1.bf16.msra.mxu0 %v939
        %1184 = vmatprep.subr.bf16.mxu0 %v944
        %1185 = vmatpush1.bf16.msra.mxu0 %v943
        %1186 = vmatprep.subr.bf16.mxu0 0
        %1187 = vmatpush1.bf16.msra.mxu0 0
        %1188 = vmatprep.subr.bf16.mxu0 0
        %1189 = vmatpush1.bf16.msra.mxu0 0
        %1190 = vmatprep.subr.bf16.mxu0 0
        %1191 = vmatpush1.bf16.msra.mxu0 0
        %1192 = vmatprep.subr.bf16.mxu0 0
        %1193 = vmatpush1.bf16.msra.mxu0 0
        %1194 = vmatprep.subr.bf16.mxu0 0
        %1195 = vmatpush1.bf16.msra.mxu0 0
        %1196 = vmatprep.subr.bf16.mxu0 0
        %1197 = vmatpush1.bf16.msra.mxu0 0
        %1198 = vmatprep.subr.bf16.mxu0 0
        %1199 = vmatpush1.bf16.msra.mxu0 0
        %1200 = vmatprep.subr.bf16.mxu0 0
        %1201 = vmatpush1.bf16.msra.mxu0 0
        %1202 = vmatprep.mubr.bf16.mxu0 0
        %1203 = vmatmul.mubr.bf16.gmra.mrb[0].mxu0 %v747
        %v1204 = vpop.f32.mrb[0].mxu0
        %v1205 = vadd.f32 %v808, %v1204
        %v1206 = vpop.f32.mrb[0].mxu0
        %v1207 = vadd.f32 %v812, %v1206
        %v1208 = vpop.f32.mrb[0].mxu0
        %v1209 = vadd.f32 %v808, %v1208
        %v1210 = vpop.f32.mrb[0].mxu0
        %v1211 = vadd.f32 %v812, %v1210
        %1212 = vmatprep.mubr.bf16.mxu0 0
        %1213 = vmatmul.mubr.bf16.gmra.mrb[0].mxu0 %v748
        %v1214 = vpop.f32.mrb[0].mxu0
        %v1215 = vadd.f32 %v808, %v1214
        %v1216 = vpop.f32.mrb[0].mxu0
        %v1217 = vadd.f32 %v812, %v1216
        %v1218 = vpop.f32.mrb[0].mxu0
        %v1219 = vadd.f32 %v808, %v1218
        %v1220 = vpop.f32.mrb[0].mxu0
        %v1221 = vadd.f32 %v812, %v1220
        %1222 = vmatprep.mubr.bf16.mxu0 0
        %1223 = vmatmul.mubr.bf16.gmra.mrb[0].mxu0 %v749
        %v1224 = vpop.f32.mrb[0].mxu0
        %v1225 = vadd.f32 %v808, %v1224
        %v1226 = vpop.f32.mrb[0].mxu0
        %v1227 = vadd.f32 %v812, %v1226
        %v1228 = vpop.f32.mrb[0].mxu0
        %v1229 = vadd.f32 %v808, %v1228
        %v1230 = vpop.f32.mrb[0].mxu0
        %v1231 = vadd.f32 %v812, %v1230
        %1232 = vmatprep.mubr.bf16.mxu0 0
        %1233 = vmatmul.mubr.bf16.gmra.mrb[0].mxu0 %v750
        %v1234 = vpop.f32.mrb[0].mxu0
        %v1235 = vadd.f32 %v808, %v1234
        %v1236 = vpop.f32.mrb[0].mxu0
        %v1237 = vadd.f32 %v812, %v1236
        %v1238 = vpop.f32.mrb[0].mxu0
        %v1239 = vadd.f32 %v808, %v1238
        %v1240 = vpop.f32.mrb[0].mxu0
        %v1241 = vadd.f32 %v812, %v1240
        %1242 = vmatprep.mubr.bf16.mxu0 0
        %1243 = vmatmul.mubr.bf16.gmra.mrb[0].mxu0 %v751
        %v1244 = vpop.f32.mrb[0].mxu0
        %v1245 = vadd.f32 %v808, %v1244
        %v1246 = vpop.f32.mrb[0].mxu0
        %v1247 = vadd.f32 %v812, %v1246
        %v1248 = vpop.f32.mrb[0].mxu0
        %v1249 = vadd.f32 %v808, %v1248
        %v1250 = vpop.f32.mrb[0].mxu0
        %v1251 = vadd.f32 %v812, %v1250
        %1252 = vmatprep.mubr.bf16.mxu0 0
        %1253 = vmatmul.mubr.bf16.gmra.mrb[0].mxu0 %v752
        %v1254 = vpop.f32.mrb[0].mxu0
        %v1255 = vadd.f32 %v808, %v1254
        %v1256 = vpop.f32.mrb[0].mxu0
        %v1257 = vadd.f32 %v812, %v1256
        %v1258 = vpop.f32.mrb[0].mxu0
        %v1259 = vadd.f32 %v808, %v1258
        %v1260 = vpop.f32.mrb[0].mxu0
        %v1261 = vadd.f32 %v812, %v1260
        %1262 = vmatprep.mubr.bf16.mxu0 0
        %1263 = vmatmul.mubr.bf16.gmra.mrb[0].mxu0 %v753
        %v1264 = vpop.f32.mrb[0].mxu0
        %v1265 = vadd.f32 %v808, %v1264
        %v1266 = vpop.f32.mrb[0].mxu0
        %v1267 = vadd.f32 %v812, %v1266
        %v1268 = vpop.f32.mrb[0].mxu0
        %v1269 = vadd.f32 %v808, %v1268
        %v1270 = vpop.f32.mrb[0].mxu0
        %v1271 = vadd.f32 %v812, %v1270
        %1272 = vmatprep.mubr.bf16.mxu0 0
        %1273 = vmatmul.mubr.bf16.gmra.mrb[0].mxu0 %v754
        %v1274 = vpop.f32.mrb[0].mxu0
        %v1275 = vadd.f32 %v808, %v1274
        %v1276 = vpop.f32.mrb[0].mxu0
        %v1277 = vadd.f32 %v812, %v1276
        %v1278 = vpop.f32.mrb[0].mxu0
        %v1279 = vadd.f32 %v808, %v1278
        %v1280 = vpop.f32.mrb[0].mxu0
        %v1281 = vadd.f32 %v812, %v1280
        %1282 = vmatprep.mubr.bf16.mxu0 0
        %1283 = vmatmul.mubr.bf16.gmra.mrb[0].mxu0 %v755
        %v1284 = vpop.f32.mrb[0].mxu0
        %v1285 = vadd.f32 %v808, %v1284
        %v1286 = vpop.f32.mrb[0].mxu0
        %v1287 = vadd.f32 %v812, %v1286
        %v1288 = vpop.f32.mrb[0].mxu0
        %v1289 = vadd.f32 %v808, %v1288
        %v1290 = vpop.f32.mrb[0].mxu0
        %v1291 = vadd.f32 %v812, %v1290
        %1292 = vmatprep.mubr.bf16.mxu0 0
        %1293 = vmatmul.mubr.bf16.gmra.mrb[0].mxu0 %v756
        %v1294 = vpop.f32.mrb[0].mxu0
        %v1295 = vadd.f32 %v808, %v1294
        %v1296 = vpop.f32.mrb[0].mxu0
        %v1297 = vadd.f32 %v812, %v1296
        %v1298 = vpop.f32.mrb[0].mxu0
        %v1299 = vadd.f32 %v808, %v1298
        %v1300 = vpop.f32.mrb[0].mxu0
        %v1301 = vadd.f32 %v812, %v1300
        %1302 = vmatprep.mubr.bf16.mxu0 0
        %1303 = vmatmul.mubr.bf16.gmra.mrb[0].mxu0 %v757
        %v1304 = vpop.f32.mrb[0].mxu0
        %v1305 = vadd.f32 %v808, %v1304
        %v1306 = vpop.f32.mrb[0].mxu0
        %v1307 = vadd.f32 %v812, %v1306
        %v1308 = vpop.f32.mrb[0].mxu0
        %v1309 = vadd.f32 %v808, %v1308
        %v1310 = vpop.f32.mrb[0].mxu0
        %v1311 = vadd.f32 %v812, %v1310
        %1312 = vmatprep.mubr.bf16.mxu0 0
        %1313 = vmatmul.mubr.bf16.gmra.mrb[0].mxu0 %v758
        %v1314 = vpop.f32.mrb[0].mxu0
        %v1315 = vadd.f32 %v808, %v1314
        %v1316 = vpop.f32.mrb[0].mxu0
        %v1317 = vadd.f32 %v812, %v1316
        %v1318 = vpop.f32.mrb[0].mxu0
        %v1319 = vadd.f32 %v808, %v1318
        %v1320 = vpop.f32.mrb[0].mxu0
        %v1321 = vadd.f32 %v812, %v1320
        %1322 = vmatprep.mubr.bf16.mxu0 0
        %1323 = vmatmul.mubr.bf16.gmra.mrb[0].mxu0 %v759
        %v1324 = vpop.f32.mrb[0].mxu0
        %v1325 = vadd.f32 %v808, %v1324
        %v1326 = vpop.f32.mrb[0].mxu0
        %v1327 = vadd.f32 %v812, %v1326
        %v1328 = vpop.f32.mrb[0].mxu0
        %v1329 = vadd.f32 %v808, %v1328
        %v1330 = vpop.f32.mrb[0].mxu0
        %v1331 = vadd.f32 %v812, %v1330
        %1332 = vmatprep.mubr.bf16.mxu0 0
        %1333 = vmatmul.mubr.bf16.gmra.mrb[0].mxu0 %v760
        %v1334 = vpop.f32.mrb[0].mxu0
        %v1335 = vadd.f32 %v808, %v1334
        %v1336 = vpop.f32.mrb[0].mxu0
        %v1337 = vadd.f32 %v812, %v1336
        %v1338 = vpop.f32.mrb[0].mxu0
        %v1339 = vadd.f32 %v808, %v1338
        %v1340 = vpop.f32.mrb[0].mxu0
        %v1341 = vadd.f32 %v812, %v1340
        %1342 = vmatprep.mubr.bf16.mxu0 0
        %1343 = vmatmul.mubr.bf16.gmra.mrb[0].mxu0 %v761
        %v1344 = vpop.f32.mrb[0].mxu0
        %v1345 = vadd.f32 %v808, %v1344
        %v1346 = vpop.f32.mrb[0].mxu0
        %v1347 = vadd.f32 %v812, %v1346
        %v1348 = vpop.f32.mrb[0].mxu0
        %v1349 = vadd.f32 %v808, %v1348
        %v1350 = vpop.f32.mrb[0].mxu0
        %v1351 = vadd.f32 %v812, %v1350
        %1352 = vmatprep.mubr.bf16.mxu0 0
        %1353 = vmatmul.mubr.bf16.gmra.mrb[0].mxu0 %v762
        %v1354 = vpop.f32.mrb[0].mxu0
        %v1355 = vadd.f32 %v808, %v1354
        %v1356 = vpop.f32.mrb[0].mxu0
        %v1357 = vadd.f32 %v812, %v1356
        %v1358 = vpop.f32.mrb[0].mxu0
        %v1359 = vadd.f32 %v808, %v1358
        %v1360 = vpop.f32.mrb[0].mxu0
        %v1361 = vadd.f32 %v812, %v1360
        %1362 = vdwg.mxu0
        %v1363 = vmul.f32 %v1012, 0.5
        %v1364 = vmul.f32 %v1014, 0.5
        %v1365 = vmul.f32 %v1205, 0.5
        %v1366 = vmul.f32 %v1207, 0.5
        %v1367 = vmul.f32 %v1016, 0.5
        %v1368 = vmul.f32 %v1018, 0.5
        %v1369 = vmul.f32 %v1209, 0.5
        %v1370 = vmul.f32 %v1211, 0.5
        %v1371 = vmul.f32 %v1022, 0.5
        %v1372 = vmul.f32 %v1024, 0.5
        %v1373 = vmul.f32 %v1215, 0.5
        %v1374 = vmul.f32 %v1217, 0.5
        %v1375 = vmul.f32 %v1026, 0.5
        %v1376 = vmul.f32 %v1028, 0.5
        %v1377 = vmul.f32 %v1219, 0.5
        %v1378 = vmul.f32 %v1221, 0.5
        %v1379 = vmul.f32 %v1032, 0.5
        %v1380 = vmul.f32 %v1034, 0.5
        %v1381 = vmul.f32 %v1225, 0.5
        %v1382 = vmul.f32 %v1227, 0.5
        %v1383 = vmul.f32 %v1036, 0.5
        %v1384 = vmul.f32 %v1038, 0.5
        %v1385 = vmul.f32 %v1229, 0.5
        %v1386 = vmul.f32 %v1231, 0.5
        %v1387 = vmul.f32 %v1042, 0.5
        %v1388 = vmul.f32 %v1044, 0.5
        %v1389 = vmul.f32 %v1235, 0.5
        %v1390 = vmul.f32 %v1237, 0.5
        %v1391 = vmul.f32 %v1046, 0.5
        %v1392 = vmul.f32 %v1048, 0.5
        %v1393 = vmul.f32 %v1239, 0.5
        %v1394 = vmul.f32 %v1241, 0.5
        %v1395 = vmul.f32 %v1052, 0.5
        %v1396 = vmul.f32 %v1054, 0.5
        %v1397 = vmul.f32 %v1245, 0.5
        %v1398 = vmul.f32 %v1247, 0.5
        %v1399 = vmul.f32 %v1056, 0.5
        %v1400 = vmul.f32 %v1058, 0.5
        %v1401 = vmul.f32 %v1249, 0.5
        %v1402 = vmul.f32 %v1251, 0.5
        %v1403 = vmul.f32 %v1062, 0.5
        %v1404 = vmul.f32 %v1064, 0.5
        %v1405 = vmul.f32 %v1255, 0.5
        %v1406 = vmul.f32 %v1257, 0.5
        %v1407 = vmul.f32 %v1066, 0.5
        %v1408 = vmul.f32 %v1068, 0.5
        %v1409 = vmul.f32 %v1259, 0.5
        %v1410 = vmul.f32 %v1261, 0.5
        %v1411 = vmul.f32 %v1072, 0.5
        %v1412 = vmul.f32 %v1074, 0.5
        %v1413 = vmul.f32 %v1265, 0.5
        %v1414 = vmul.f32 %v1267, 0.5
        %v1415 = vmul.f32 %v1076, 0.5
        %v1416 = vmul.f32 %v1078, 0.5
        %v1417 = vmul.f32 %v1269, 0.5
        %v1418 = vmul.f32 %v1271, 0.5
        %v1419 = vmul.f32 %v1082, 0.5
        %v1420 = vmul.f32 %v1084, 0.5
        %v1421 = vmul.f32 %v1275, 0.5
        %v1422 = vmul.f32 %v1277, 0.5
        %v1423 = vmul.f32 %v1086, 0.5
        %v1424 = vmul.f32 %v1088, 0.5
        %v1425 = vmul.f32 %v1279, 0.5
        %v1426 = vmul.f32 %v1281, 0.5
        %v1427 = vmul.f32 %v1092, 0.5
        %v1428 = vmul.f32 %v1094, 0.5
        %v1429 = vmul.f32 %v1285, 0.5
        %v1430 = vmul.f32 %v1287, 0.5
        %v1431 = vmul.f32 %v1096, 0.5
        %v1432 = vmul.f32 %v1098, 0.5
        %v1433 = vmul.f32 %v1289, 0.5
        %v1434 = vmul.f32 %v1291, 0.5
        %v1435 = vmul.f32 %v1102, 0.5
        %v1436 = vmul.f32 %v1104, 0.5
        %v1437 = vmul.f32 %v1295, 0.5
        %v1438 = vmul.f32 %v1297, 0.5
        %v1439 = vmul.f32 %v1106, 0.5
        %v1440 = vmul.f32 %v1108, 0.5
        %v1441 = vmul.f32 %v1299, 0.5
        %v1442 = vmul.f32 %v1301, 0.5
        %v1443 = vmul.f32 %v1112, 0.5
        %v1444 = vmul.f32 %v1114, 0.5
        %v1445 = vmul.f32 %v1305, 0.5
        %v1446 = vmul.f32 %v1307, 0.5
        %v1447 = vmul.f32 %v1116, 0.5
        %v1448 = vmul.f32 %v1118, 0.5
        %v1449 = vmul.f32 %v1309, 0.5
        %v1450 = vmul.f32 %v1311, 0.5
        %v1451 = vmul.f32 %v1122, 0.5
        %v1452 = vmul.f32 %v1124, 0.5
        %v1453 = vmul.f32 %v1315, 0.5
        %v1454 = vmul.f32 %v1317, 0.5
        %v1455 = vmul.f32 %v1126, 0.5
        %v1456 = vmul.f32 %v1128, 0.5
        %v1457 = vmul.f32 %v1319, 0.5
        %v1458 = vmul.f32 %v1321, 0.5
        %v1459 = vmul.f32 %v1132, 0.5
        %v1460 = vmul.f32 %v1134, 0.5
        %v1461 = vmul.f32 %v1325, 0.5
        %v1462 = vmul.f32 %v1327, 0.5
        %v1463 = vmul.f32 %v1136, 0.5
        %v1464 = vmul.f32 %v1138, 0.5
        %v1465 = vmul.f32 %v1329, 0.5
        %v1466 = vmul.f32 %v1331, 0.5
        %v1467 = vmul.f32 %v1142, 0.5
        %v1468 = vmul.f32 %v1144, 0.5
        %v1469 = vmul.f32 %v1335, 0.5
        %v1470 = vmul.f32 %v1337, 0.5
        %v1471 = vmul.f32 %v1146, 0.5
        %v1472 = vmul.f32 %v1148, 0.5
        %v1473 = vmul.f32 %v1339, 0.5
        %v1474 = vmul.f32 %v1341, 0.5
        %v1475 = vmul.f32 %v1152, 0.5
        %v1476 = vmul.f32 %v1154, 0.5
        %v1477 = vmul.f32 %v1345, 0.5
        %v1478 = vmul.f32 %v1347, 0.5
        %v1479 = vmul.f32 %v1156, 0.5
        %v1480 = vmul.f32 %v1158, 0.5
        %v1481 = vmul.f32 %v1349, 0.5
        %v1482 = vmul.f32 %v1351, 0.5
        %v1483 = vmul.f32 %v1162, 0.5
        %v1484 = vmul.f32 %v1164, 0.5
        %v1485 = vmul.f32 %v1355, 0.5
        %v1486 = vmul.f32 %v1357, 0.5
        %v1487 = vmul.f32 %v1166, 0.5
        %v1488 = vmul.f32 %v1168, 0.5
        %v1489 = vmul.f32 %v1359, 0.5
        %v1490 = vmul.f32 %v1361, 0.5
        %v1491 = vmul.f32 %v1012, 0.70710677
        %v1492 = vmul.f32 %v1014, 0.70710677
        %v1493 = vmul.f32 %v1205, 0.70710677
        %v1494 = vmul.f32 %v1207, 0.70710677
        %v1495 = vmul.f32 %v1016, 0.70710677
        %v1496 = vmul.f32 %v1018, 0.70710677
        %v1497 = vmul.f32 %v1209, 0.70710677
        %v1498 = vmul.f32 %v1211, 0.70710677
        %v1499 = vmul.f32 %v1022, 0.70710677
        %v1500 = vmul.f32 %v1024, 0.70710677
        %v1501 = vmul.f32 %v1215, 0.70710677
        %v1502 = vmul.f32 %v1217, 0.70710677
        %v1503 = vmul.f32 %v1026, 0.70710677
        %v1504 = vmul.f32 %v1028, 0.70710677
        %v1505 = vmul.f32 %v1219, 0.70710677
        %v1506 = vmul.f32 %v1221, 0.70710677
        %v1507 = vmul.f32 %v1032, 0.70710677
        %v1508 = vmul.f32 %v1034, 0.70710677
        %v1509 = vmul.f32 %v1225, 0.70710677
        %v1510 = vmul.f32 %v1227, 0.70710677
        %v1511 = vmul.f32 %v1036, 0.70710677
        %v1512 = vmul.f32 %v1038, 0.70710677
        %v1513 = vmul.f32 %v1229, 0.70710677
        %v1514 = vmul.f32 %v1231, 0.70710677
        %v1515 = vmul.f32 %v1042, 0.70710677
        %v1516 = vmul.f32 %v1044, 0.70710677
        %v1517 = vmul.f32 %v1235, 0.70710677
        %v1518 = vmul.f32 %v1237, 0.70710677
        %v1519 = vmul.f32 %v1046, 0.70710677
        %v1520 = vmul.f32 %v1048, 0.70710677
        %v1521 = vmul.f32 %v1239, 0.70710677
        %v1522 = vmul.f32 %v1241, 0.70710677
        %v1523 = vmul.f32 %v1052, 0.70710677
        %v1524 = vmul.f32 %v1054, 0.70710677
        %v1525 = vmul.f32 %v1245, 0.70710677
        %v1526 = vmul.f32 %v1247, 0.70710677
        %v1527 = vmul.f32 %v1056, 0.70710677
        %v1528 = vmul.f32 %v1058, 0.70710677
        %v1529 = vmul.f32 %v1249, 0.70710677
        %v1530 = vmul.f32 %v1251, 0.70710677
        %v1531 = vmul.f32 %v1062, 0.70710677
        %v1532 = vmul.f32 %v1064, 0.70710677
        %v1533 = vmul.f32 %v1255, 0.70710677
        %v1534 = vmul.f32 %v1257, 0.70710677
        %v1535 = vmul.f32 %v1066, 0.70710677
        %v1536 = vmul.f32 %v1068, 0.70710677
        %v1537 = vmul.f32 %v1259, 0.70710677
        %v1538 = vmul.f32 %v1261, 0.70710677
        %v1539 = vmul.f32 %v1072, 0.70710677
        %v1540 = vmul.f32 %v1074, 0.70710677
        %v1541 = vmul.f32 %v1265, 0.70710677
        %v1542 = vmul.f32 %v1267, 0.70710677
        %v1543 = vmul.f32 %v1076, 0.70710677
        %v1544 = vmul.f32 %v1078, 0.70710677
        %v1545 = vmul.f32 %v1269, 0.70710677
        %v1546 = vmul.f32 %v1271, 0.70710677
        %v1547 = vmul.f32 %v1082, 0.70710677
        %v1548 = vmul.f32 %v1084, 0.70710677
        %v1549 = vmul.f32 %v1275, 0.70710677
        %v1550 = vmul.f32 %v1277, 0.70710677
        %v1551 = vmul.f32 %v1086, 0.70710677
        %v1552 = vmul.f32 %v1088, 0.70710677
        %v1553 = vmul.f32 %v1279, 0.70710677
        %v1554 = vmul.f32 %v1281, 0.70710677
        %v1555 = vmul.f32 %v1092, 0.70710677
        %v1556 = vmul.f32 %v1094, 0.70710677
        %v1557 = vmul.f32 %v1285, 0.70710677
        %v1558 = vmul.f32 %v1287, 0.70710677
        %v1559 = vmul.f32 %v1096, 0.70710677
        %v1560 = vmul.f32 %v1098, 0.70710677
        %v1561 = vmul.f32 %v1289, 0.70710677
        %v1562 = vmul.f32 %v1291, 0.70710677
        %v1563 = vmul.f32 %v1102, 0.70710677
        %v1564 = vmul.f32 %v1104, 0.70710677
        %v1565 = vmul.f32 %v1295, 0.70710677
        %v1566 = vmul.f32 %v1297, 0.70710677
        %v1567 = vmul.f32 %v1106, 0.70710677
        %v1568 = vmul.f32 %v1108, 0.70710677
        %v1569 = vmul.f32 %v1299, 0.70710677
        %v1570 = vmul.f32 %v1301, 0.70710677
        %v1571 = vmul.f32 %v1112, 0.70710677
        %v1572 = vmul.f32 %v1114, 0.70710677
        %v1573 = vmul.f32 %v1305, 0.70710677
        %v1574 = vmul.f32 %v1307, 0.70710677
        %v1575 = vmul.f32 %v1116, 0.70710677
        %v1576 = vmul.f32 %v1118, 0.70710677
        %v1577 = vmul.f32 %v1309, 0.70710677
        %v1578 = vmul.f32 %v1311, 0.70710677
        %v1579 = vmul.f32 %v1122, 0.70710677
        %v1580 = vmul.f32 %v1124, 0.70710677
        %v1581 = vmul.f32 %v1315, 0.70710677
        %v1582 = vmul.f32 %v1317, 0.70710677
        %v1583 = vmul.f32 %v1126, 0.70710677
        %v1584 = vmul.f32 %v1128, 0.70710677
        %v1585 = vmul.f32 %v1319, 0.70710677
        %v1586 = vmul.f32 %v1321, 0.70710677
        %v1587 = vmul.f32 %v1132, 0.70710677
        %v1588 = vmul.f32 %v1134, 0.70710677
        %v1589 = vmul.f32 %v1325, 0.70710677
        %v1590 = vmul.f32 %v1327, 0.70710677
        %v1591 = vmul.f32 %v1136, 0.70710677
        %v1592 = vmul.f32 %v1138, 0.70710677
        %v1593 = vmul.f32 %v1329, 0.70710677
        %v1594 = vmul.f32 %v1331, 0.70710677
        %v1595 = vmul.f32 %v1142, 0.70710677
        %v1596 = vmul.f32 %v1144, 0.70710677
        %v1597 = vmul.f32 %v1335, 0.70710677
        %v1598 = vmul.f32 %v1337, 0.70710677
        %v1599 = vmul.f32 %v1146, 0.70710677
        %v1600 = vmul.f32 %v1148, 0.70710677
        %v1601 = vmul.f32 %v1339, 0.70710677
        %v1602 = vmul.f32 %v1341, 0.70710677
        %v1603 = vmul.f32 %v1152, 0.70710677
        %v1604 = vmul.f32 %v1154, 0.70710677
        %v1605 = vmul.f32 %v1345, 0.70710677
        %v1606 = vmul.f32 %v1347, 0.70710677
        %v1607 = vmul.f32 %v1156, 0.70710677
        %v1608 = vmul.f32 %v1158, 0.70710677
        %v1609 = vmul.f32 %v1349, 0.70710677
        %v1610 = vmul.f32 %v1351, 0.70710677
        %v1611 = vmul.f32 %v1162, 0.70710677
        %v1612 = vmul.f32 %v1164, 0.70710677
        %v1613 = vmul.f32 %v1355, 0.70710677
        %v1614 = vmul.f32 %v1357, 0.70710677
        %v1615 = vmul.f32 %v1166, 0.70710677
        %v1616 = vmul.f32 %v1168, 0.70710677
        %v1617 = vmul.f32 %v1359, 0.70710677
        %v1618 = vmul.f32 %v1361, 0.70710677
        %v1619 = verf.f32.pop %v1491
        %v1620 = verf.f32.pop %v1492
        %v1621 = verf.f32.pop %v1493
        %v1622 = verf.f32.pop %v1494
        %v1623 = verf.f32.pop %v1495
        %v1624 = verf.f32.pop %v1496
        %v1625 = verf.f32.pop %v1497
        %v1626 = verf.f32.pop %v1498
        %v1627 = verf.f32.pop %v1499
        %v1628 = verf.f32.pop %v1500
        %v1629 = verf.f32.pop %v1501
        %v1630 = verf.f32.pop %v1502
        %v1631 = verf.f32.pop %v1503
        %v1632 = verf.f32.pop %v1504
        %v1633 = verf.f32.pop %v1505
        %v1634 = verf.f32.pop %v1506
        %v1635 = verf.f32.pop %v1507
        %v1636 = verf.f32.pop %v1508
        %v1637 = verf.f32.pop %v1509
        %v1638 = verf.f32.pop %v1510
        %v1639 = verf.f32.pop %v1511
        %v1640 = verf.f32.pop %v1512
        %v1641 = verf.f32.pop %v1513
        %v1642 = verf.f32.pop %v1514
        %v1643 = verf.f32.pop %v1515
        %v1644 = verf.f32.pop %v1516
        %v1645 = verf.f32.pop %v1517
        %v1646 = verf.f32.pop %v1518
        %v1647 = verf.f32.pop %v1519
        %v1648 = verf.f32.pop %v1520
        %v1649 = verf.f32.pop %v1521
        %v1650 = verf.f32.pop %v1522
        %v1651 = verf.f32.pop %v1523
        %v1652 = verf.f32.pop %v1524
        %v1653 = verf.f32.pop %v1525
        %v1654 = verf.f32.pop %v1526
        %v1655 = verf.f32.pop %v1527
        %v1656 = verf.f32.pop %v1528
        %v1657 = verf.f32.pop %v1529
        %v1658 = verf.f32.pop %v1530
        %v1659 = verf.f32.pop %v1531
        %v1660 = verf.f32.pop %v1532
        %v1661 = verf.f32.pop %v1533
        %v1662 = verf.f32.pop %v1534
        %v1663 = verf.f32.pop %v1535
        %v1664 = verf.f32.pop %v1536
        %v1665 = verf.f32.pop %v1537
        %v1666 = verf.f32.pop %v1538
        %v1667 = verf.f32.pop %v1539
        %v1668 = verf.f32.pop %v1540
        %v1669 = verf.f32.pop %v1541
        %v1670 = verf.f32.pop %v1542
        %v1671 = verf.f32.pop %v1543
        %v1672 = verf.f32.pop %v1544
        %v1673 = verf.f32.pop %v1545
        %v1674 = verf.f32.pop %v1546
        %v1675 = verf.f32.pop %v1547
        %v1676 = verf.f32.pop %v1548
        %v1677 = verf.f32.pop %v1549
        %v1678 = verf.f32.pop %v1550
        %v1679 = verf.f32.pop %v1551
        %v1680 = verf.f32.pop %v1552
        %v1681 = verf.f32.pop %v1553
        %v1682 = verf.f32.pop %v1554
        %v1683 = verf.f32.pop %v1555
        %v1684 = verf.f32.pop %v1556
        %v1685 = verf.f32.pop %v1557
        %v1686 = verf.f32.pop %v1558
        %v1687 = verf.f32.pop %v1559
        %v1688 = verf.f32.pop %v1560
        %v1689 = verf.f32.pop %v1561
        %v1690 = verf.f32.pop %v1562
        %v1691 = verf.f32.pop %v1563
        %v1692 = verf.f32.pop %v1564
        %v1693 = verf.f32.pop %v1565
        %v1694 = verf.f32.pop %v1566
        %v1695 = verf.f32.pop %v1567
        %v1696 = verf.f32.pop %v1568
        %v1697 = verf.f32.pop %v1569
        %v1698 = verf.f32.pop %v1570
        %v1699 = verf.f32.pop %v1571
        %v1700 = verf.f32.pop %v1572
        %v1701 = verf.f32.pop %v1573
        %v1702 = verf.f32.pop %v1574
        %v1703 = verf.f32.pop %v1575
        %v1704 = verf.f32.pop %v1576
        %v1705 = verf.f32.pop %v1577
        %v1706 = verf.f32.pop %v1578
        %v1707 = verf.f32.pop %v1579
        %v1708 = verf.f32.pop %v1580
        %v1709 = verf.f32.pop %v1581
        %v1710 = verf.f32.pop %v1582
        %v1711 = verf.f32.pop %v1583
        %v1712 = verf.f32.pop %v1584
        %v1713 = verf.f32.pop %v1585
        %v1714 = verf.f32.pop %v1586
        %v1715 = verf.f32.pop %v1587
        %v1716 = verf.f32.pop %v1588
        %v1717 = verf.f32.pop %v1589
        %v1718 = verf.f32.pop %v1590
        %v1719 = verf.f32.pop %v1591
        %v1720 = verf.f32.pop %v1592
        %v1721 = verf.f32.pop %v1593
        %v1722 = verf.f32.pop %v1594
        %v1723 = verf.f32.pop %v1595
        %v1724 = verf.f32.pop %v1596
        %v1725 = verf.f32.pop %v1597
        %v1726 = verf.f32.pop %v1598
        %v1727 = verf.f32.pop %v1599
        %v1728 = verf.f32.pop %v1600
        %v1729 = verf.f32.pop %v1601
        %v1730 = verf.f32.pop %v1602
        %v1731 = verf.f32.pop %v1603
        %v1732 = verf.f32.pop %v1604
        %v1733 = verf.f32.pop %v1605
        %v1734 = verf.f32.pop %v1606
        %v1735 = verf.f32.pop %v1607
        %v1736 = verf.f32.pop %v1608
        %v1737 = verf.f32.pop %v1609
        %v1738 = verf.f32.pop %v1610
        %v1739 = verf.f32.pop %v1611
        %v1740 = verf.f32.pop %v1612
        %v1741 = verf.f32.pop %v1613
        %v1742 = verf.f32.pop %v1614
        %v1743 = verf.f32.pop %v1615
        %v1744 = verf.f32.pop %v1616
        %v1745 = verf.f32.pop %v1617
        %v1746 = verf.f32.pop %v1618
        %v1747 = vadd.f32 %v1619, 1.0
        %v1748 = vadd.f32 %v1620, 1.0
        %v1749 = vadd.f32 %v1621, 1.0
        %v1750 = vadd.f32 %v1622, 1.0
        %v1751 = vadd.f32 %v1623, 1.0
        %v1752 = vadd.f32 %v1624, 1.0
        %v1753 = vadd.f32 %v1625, 1.0
        %v1754 = vadd.f32 %v1626, 1.0
        %v1755 = vadd.f32 %v1627, 1.0
        %v1756 = vadd.f32 %v1628, 1.0
        %v1757 = vadd.f32 %v1629, 1.0
        %v1758 = vadd.f32 %v1630, 1.0
        %v1759 = vadd.f32 %v1631, 1.0
        %v1760 = vadd.f32 %v1632, 1.0
        %v1761 = vadd.f32 %v1633, 1.0
        %v1762 = vadd.f32 %v1634, 1.0
        %v1763 = vadd.f32 %v1635, 1.0
        %v1764 = vadd.f32 %v1636, 1.0
        %v1765 = vadd.f32 %v1637, 1.0
        %v1766 = vadd.f32 %v1638, 1.0
        %v1767 = vadd.f32 %v1639, 1.0
        %v1768 = vadd.f32 %v1640, 1.0
        %v1769 = vadd.f32 %v1641, 1.0
        %v1770 = vadd.f32 %v1642, 1.0
        %v1771 = vadd.f32 %v1643, 1.0
        %v1772 = vadd.f32 %v1644, 1.0
        %v1773 = vadd.f32 %v1645, 1.0
        %v1774 = vadd.f32 %v1646, 1.0
        %v1775 = vadd.f32 %v1647, 1.0
        %v1776 = vadd.f32 %v1648, 1.0
        %v1777 = vadd.f32 %v1649, 1.0
        %v1778 = vadd.f32 %v1650, 1.0
        %v1779 = vadd.f32 %v1651, 1.0
        %v1780 = vadd.f32 %v1652, 1.0
        %v1781 = vadd.f32 %v1653, 1.0
        %v1782 = vadd.f32 %v1654, 1.0
        %v1783 = vadd.f32 %v1655, 1.0
        %v1784 = vadd.f32 %v1656, 1.0
        %v1785 = vadd.f32 %v1657, 1.0
        %v1786 = vadd.f32 %v1658, 1.0
        %v1787 = vadd.f32 %v1659, 1.0
        %v1788 = vadd.f32 %v1660, 1.0
        %v1789 = vadd.f32 %v1661, 1.0
        %v1790 = vadd.f32 %v1662, 1.0
        %v1791 = vadd.f32 %v1663, 1.0
        %v1792 = vadd.f32 %v1664, 1.0
        %v1793 = vadd.f32 %v1665, 1.0
        %v1794 = vadd.f32 %v1666, 1.0
        %v1795 = vadd.f32 %v1667, 1.0
        %v1796 = vadd.f32 %v1668, 1.0
        %v1797 = vadd.f32 %v1669, 1.0
        %v1798 = vadd.f32 %v1670, 1.0
        %v1799 = vadd.f32 %v1671, 1.0
        %v1800 = vadd.f32 %v1672, 1.0
        %v1801 = vadd.f32 %v1673, 1.0
        %v1802 = vadd.f32 %v1674, 1.0
        %v1803 = vadd.f32 %v1675, 1.0
        %v1804 = vadd.f32 %v1676, 1.0
        %v1805 = vadd.f32 %v1677, 1.0
        %v1806 = vadd.f32 %v1678, 1.0
        %v1807 = vadd.f32 %v1679, 1.0
        %v1808 = vadd.f32 %v1680, 1.0
        %v1809 = vadd.f32 %v1681, 1.0
        %v1810 = vadd.f32 %v1682, 1.0
        %v1811 = vadd.f32 %v1683, 1.0
        %v1812 = vadd.f32 %v1684, 1.0
        %v1813 = vadd.f32 %v1685, 1.0
        %v1814 = vadd.f32 %v1686, 1.0
        %v1815 = vadd.f32 %v1687, 1.0
        %v1816 = vadd.f32 %v1688, 1.0
        %v1817 = vadd.f32 %v1689, 1.0
        %v1818 = vadd.f32 %v1690, 1.0
        %v1819 = vadd.f32 %v1691, 1.0
        %v1820 = vadd.f32 %v1692, 1.0
        %v1821 = vadd.f32 %v1693, 1.0
        %v1822 = vadd.f32 %v1694, 1.0
        %v1823 = vadd.f32 %v1695, 1.0
        %v1824 = vadd.f32 %v1696, 1.0
        %v1825 = vadd.f32 %v1697, 1.0
        %v1826 = vadd.f32 %v1698, 1.0
        %v1827 = vadd.f32 %v1699, 1.0
        %v1828 = vadd.f32 %v1700, 1.0
        %v1829 = vadd.f32 %v1701, 1.0
        %v1830 = vadd.f32 %v1702, 1.0
        %v1831 = vadd.f32 %v1703, 1.0
        %v1832 = vadd.f32 %v1704, 1.0
        %v1833 = vadd.f32 %v1705, 1.0
        %v1834 = vadd.f32 %v1706, 1.0
        %v1835 = vadd.f32 %v1707, 1.0
        %v1836 = vadd.f32 %v1708, 1.0
        %v1837 = vadd.f32 %v1709, 1.0
        %v1838 = vadd.f32 %v1710, 1.0
        %v1839 = vadd.f32 %v1711, 1.0
        %v1840 = vadd.f32 %v1712, 1.0
        %v1841 = vadd.f32 %v1713, 1.0
        %v1842 = vadd.f32 %v1714, 1.0
        %v1843 = vadd.f32 %v1715, 1.0
        %v1844 = vadd.f32 %v1716, 1.0
        %v1845 = vadd.f32 %v1717, 1.0
        %v1846 = vadd.f32 %v1718, 1.0
        %v1847 = vadd.f32 %v1719, 1.0
        %v1848 = vadd.f32 %v1720, 1.0
        %v1849 = vadd.f32 %v1721, 1.0
        %v1850 = vadd.f32 %v1722, 1.0
        %v1851 = vadd.f32 %v1723, 1.0
        %v1852 = vadd.f32 %v1724, 1.0
        %v1853 = vadd.f32 %v1725, 1.0
        %v1854 = vadd.f32 %v1726, 1.0
        %v1855 = vadd.f32 %v1727, 1.0
        %v1856 = vadd.f32 %v1728, 1.0
        %v1857 = vadd.f32 %v1729, 1.0
        %v1858 = vadd.f32 %v1730, 1.0
        %v1859 = vadd.f32 %v1731, 1.0
        %v1860 = vadd.f32 %v1732, 1.0
        %v1861 = vadd.f32 %v1733, 1.0
        %v1862 = vadd.f32 %v1734, 1.0
        %v1863 = vadd.f32 %v1735, 1.0
        %v1864 = vadd.f32 %v1736, 1.0
        %v1865 = vadd.f32 %v1737, 1.0
        %v1866 = vadd.f32 %v1738, 1.0
        %v1867 = vadd.f32 %v1739, 1.0
        %v1868 = vadd.f32 %v1740, 1.0
        %v1869 = vadd.f32 %v1741, 1.0
        %v1870 = vadd.f32 %v1742, 1.0
        %v1871 = vadd.f32 %v1743, 1.0
        %v1872 = vadd.f32 %v1744, 1.0
        %v1873 = vadd.f32 %v1745, 1.0
        %v1874 = vadd.f32 %v1746, 1.0
        %v1875 = vmul.f32 %v1363, %v1747
        %v1876 = vmul.f32 %v1364, %v1748
        %v1877 = vmul.f32 %v1365, %v1749
        %v1878 = vmul.f32 %v1366, %v1750
        %v1879 = vmul.f32 %v1367, %v1751
        %v1880 = vmul.f32 %v1368, %v1752
        %v1881 = vmul.f32 %v1369, %v1753
        %v1882 = vmul.f32 %v1370, %v1754
        %v1883 = vmul.f32 %v1371, %v1755
        %v1884 = vmul.f32 %v1372, %v1756
        %v1885 = vmul.f32 %v1373, %v1757
        %v1886 = vmul.f32 %v1374, %v1758
        %v1887 = vmul.f32 %v1375, %v1759
        %v1888 = vmul.f32 %v1376, %v1760
        %v1889 = vmul.f32 %v1377, %v1761
        %v1890 = vmul.f32 %v1378, %v1762
        %v1891 = vmul.f32 %v1379, %v1763
        %v1892 = vmul.f32 %v1380, %v1764
        %v1893 = vmul.f32 %v1381, %v1765
        %v1894 = vmul.f32 %v1382, %v1766
        %v1895 = vmul.f32 %v1383, %v1767
        %v1896 = vmul.f32 %v1384, %v1768
        %v1897 = vmul.f32 %v1385, %v1769
        %v1898 = vmul.f32 %v1386, %v1770
        %v1899 = vmul.f32 %v1387, %v1771
        %v1900 = vmul.f32 %v1388, %v1772
        %v1901 = vmul.f32 %v1389, %v1773
        %v1902 = vmul.f32 %v1390, %v1774
        %v1903 = vmul.f32 %v1391, %v1775
        %v1904 = vmul.f32 %v1392, %v1776
        %v1905 = vmul.f32 %v1393, %v1777
        %v1906 = vmul.f32 %v1394, %v1778
        %v1907 = vmul.f32 %v1395, %v1779
        %v1908 = vmul.f32 %v1396, %v1780
        %v1909 = vmul.f32 %v1397, %v1781
        %v1910 = vmul.f32 %v1398, %v1782
        %v1911 = vmul.f32 %v1399, %v1783
        %v1912 = vmul.f32 %v1400, %v1784
        %v1913 = vmul.f32 %v1401, %v1785
        %v1914 = vmul.f32 %v1402, %v1786
        %v1915 = vmul.f32 %v1403, %v1787
        %v1916 = vmul.f32 %v1404, %v1788
        %v1917 = vmul.f32 %v1405, %v1789
        %v1918 = vmul.f32 %v1406, %v1790
        %v1919 = vmul.f32 %v1407, %v1791
        %v1920 = vmul.f32 %v1408, %v1792
        %v1921 = vmul.f32 %v1409, %v1793
        %v1922 = vmul.f32 %v1410, %v1794
        %v1923 = vmul.f32 %v1411, %v1795
        %v1924 = vmul.f32 %v1412, %v1796
        %v1925 = vmul.f32 %v1413, %v1797
        %v1926 = vmul.f32 %v1414, %v1798
        %v1927 = vmul.f32 %v1415, %v1799
        %v1928 = vmul.f32 %v1416, %v1800
        %v1929 = vmul.f32 %v1417, %v1801
        %v1930 = vmul.f32 %v1418, %v1802
        %v1931 = vmul.f32 %v1419, %v1803
        %v1932 = vmul.f32 %v1420, %v1804
        %v1933 = vmul.f32 %v1421, %v1805
        %v1934 = vmul.f32 %v1422, %v1806
        %v1935 = vmul.f32 %v1423, %v1807
        %v1936 = vmul.f32 %v1424, %v1808
        %v1937 = vmul.f32 %v1425, %v1809
        %v1938 = vmul.f32 %v1426, %v1810
        %v1939 = vmul.f32 %v1427, %v1811
        %v1940 = vmul.f32 %v1428, %v1812
        %v1941 = vmul.f32 %v1429, %v1813
        %v1942 = vmul.f32 %v1430, %v1814
        %v1943 = vmul.f32 %v1431, %v1815
        %v1944 = vmul.f32 %v1432, %v1816
        %v1945 = vmul.f32 %v1433, %v1817
        %v1946 = vmul.f32 %v1434, %v1818
        %v1947 = vmul.f32 %v1435, %v1819
        %v1948 = vmul.f32 %v1436, %v1820
        %v1949 = vmul.f32 %v1437, %v1821
        %v1950 = vmul.f32 %v1438, %v1822
        %v1951 = vmul.f32 %v1439, %v1823
        %v1952 = vmul.f32 %v1440, %v1824
        %v1953 = vmul.f32 %v1441, %v1825
        %v1954 = vmul.f32 %v1442, %v1826
        %v1955 = vmul.f32 %v1443, %v1827
        %v1956 = vmul.f32 %v1444, %v1828
        %v1957 = vmul.f32 %v1445, %v1829
        %v1958 = vmul.f32 %v1446, %v1830
        %v1959 = vmul.f32 %v1447, %v1831
        %v1960 = vmul.f32 %v1448, %v1832
        %v1961 = vmul.f32 %v1449, %v1833
        %v1962 = vmul.f32 %v1450, %v1834
        %v1963 = vmul.f32 %v1451, %v1835
        %v1964 = vmul.f32 %v1452, %v1836
        %v1965 = vmul.f32 %v1453, %v1837
        %v1966 = vmul.f32 %v1454, %v1838
        %v1967 = vmul.f32 %v1455, %v1839
        %v1968 = vmul.f32 %v1456, %v1840
        %v1969 = vmul.f32 %v1457, %v1841
        %v1970 = vmul.f32 %v1458, %v1842
        %v1971 = vmul.f32 %v1459, %v1843
        %v1972 = vmul.f32 %v1460, %v1844
        %v1973 = vmul.f32 %v1461, %v1845
        %v1974 = vmul.f32 %v1462, %v1846
        %v1975 = vmul.f32 %v1463, %v1847
        %v1976 = vmul.f32 %v1464, %v1848
        %v1977 = vmul.f32 %v1465, %v1849
        %v1978 = vmul.f32 %v1466, %v1850
        %v1979 = vmul.f32 %v1467, %v1851
        %v1980 = vmul.f32 %v1468, %v1852
        %v1981 = vmul.f32 %v1469, %v1853
        %v1982 = vmul.f32 %v1470, %v1854
        %v1983 = vmul.f32 %v1471, %v1855
        %v1984 = vmul.f32 %v1472, %v1856
        %v1985 = vmul.f32 %v1473, %v1857
        %v1986 = vmul.f32 %v1474, %v1858
        %v1987 = vmul.f32 %v1475, %v1859
        %v1988 = vmul.f32 %v1476, %v1860
        %v1989 = vmul.f32 %v1477, %v1861
        %v1990 = vmul.f32 %v1478, %v1862
        %v1991 = vmul.f32 %v1479, %v1863
        %v1992 = vmul.f32 %v1480, %v1864
        %v1993 = vmul.f32 %v1481, %v1865
        %v1994 = vmul.f32 %v1482, %v1866
        %v1995 = vmul.f32 %v1483, %v1867
        %v1996 = vmul.f32 %v1484, %v1868
        %v1997 = vmul.f32 %v1485, %v1869
        %v1998 = vmul.f32 %v1486, %v1870
        %v1999 = vmul.f32 %v1487, %v1871
        %v2000 = vmul.f32 %v1488, %v1872
        %v2001 = vmul.f32 %v1489, %v1873
        %v2002 = vmul.f32 %v1490, %v1874
        %v2003 = vpack.c.bf16 %v1879, %v1875
        %v2004 = vpack.c.bf16 %v1880, %v1876
        %v2005 = vpack.c.bf16 %v1881, %v1877
        %v2006 = vpack.c.bf16 %v1882, %v1878
        %v2007 = vpack.c.bf16 %v1887, %v1883
        %v2008 = vpack.c.bf16 %v1888, %v1884
        %v2009 = vpack.c.bf16 %v1889, %v1885
        %v2010 = vpack.c.bf16 %v1890, %v1886
        %v2011 = vpack.c.bf16 %v1895, %v1891
        %v2012 = vpack.c.bf16 %v1896, %v1892
        %v2013 = vpack.c.bf16 %v1897, %v1893
        %v2014 = vpack.c.bf16 %v1898, %v1894
        %v2015 = vpack.c.bf16 %v1903, %v1899
        %v2016 = vpack.c.bf16 %v1904, %v1900
        %v2017 = vpack.c.bf16 %v1905, %v1901
        %v2018 = vpack.c.bf16 %v1906, %v1902
        %v2019 = vpack.c.bf16 %v1911, %v1907
        %v2020 = vpack.c.bf16 %v1912, %v1908
        %v2021 = vpack.c.bf16 %v1913, %v1909
        %v2022 = vpack.c.bf16 %v1914, %v1910
        %v2023 = vpack.c.bf16 %v1919, %v1915
        %v2024 = vpack.c.bf16 %v1920, %v1916
        %v2025 = vpack.c.bf16 %v1921, %v1917
        %v2026 = vpack.c.bf16 %v1922, %v1918
        %v2027 = vpack.c.bf16 %v1927, %v1923
        %v2028 = vpack.c.bf16 %v1928, %v1924
        %v2029 = vpack.c.bf16 %v1929, %v1925
        %v2030 = vpack.c.bf16 %v1930, %v1926
        %v2031 = vpack.c.bf16 %v1935, %v1931
        %v2032 = vpack.c.bf16 %v1936, %v1932
        %v2033 = vpack.c.bf16 %v1937, %v1933
        %v2034 = vpack.c.bf16 %v1938, %v1934
        %v2035 = vpack.c.bf16 %v1943, %v1939
        %v2036 = vpack.c.bf16 %v1944, %v1940
        %v2037 = vpack.c.bf16 %v1945, %v1941
        %v2038 = vpack.c.bf16 %v1946, %v1942
        %v2039 = vpack.c.bf16 %v1951, %v1947
        %v2040 = vpack.c.bf16 %v1952, %v1948
        %v2041 = vpack.c.bf16 %v1953, %v1949
        %v2042 = vpack.c.bf16 %v1954, %v1950
        %v2043 = vpack.c.bf16 %v1959, %v1955
        %v2044 = vpack.c.bf16 %v1960, %v1956
        %v2045 = vpack.c.bf16 %v1961, %v1957
        %v2046 = vpack.c.bf16 %v1962, %v1958
        %v2047 = vpack.c.bf16 %v1967, %v1963
        %v2048 = vpack.c.bf16 %v1968, %v1964
        %v2049 = vpack.c.bf16 %v1969, %v1965
        %v2050 = vpack.c.bf16 %v1970, %v1966
        %v2051 = vpack.c.bf16 %v1975, %v1971
        %v2052 = vpack.c.bf16 %v1976, %v1972
        %v2053 = vpack.c.bf16 %v1977, %v1973
        %v2054 = vpack.c.bf16 %v1978, %v1974
        %v2055 = vpack.c.bf16 %v1983, %v1979
        %v2056 = vpack.c.bf16 %v1984, %v1980
        %v2057 = vpack.c.bf16 %v1985, %v1981
        %v2058 = vpack.c.bf16 %v1986, %v1982
        %v2059 = vpack.c.bf16 %v1991, %v1987
        %v2060 = vpack.c.bf16 %v1992, %v1988
        %v2061 = vpack.c.bf16 %v1993, %v1989
        %v2062 = vpack.c.bf16 %v1994, %v1990
        %v2063 = vpack.c.bf16 %v1999, %v1995
        %v2064 = vpack.c.bf16 %v2000, %v1996
        %v2065 = vpack.c.bf16 %v2001, %v1997
        %v2066 = vpack.c.bf16 %v2002, %v1998
        %2067 = vst [vmem:[#allocation2] sm:$0xff] %v2003
        %2068 = vst [vmem:[#allocation2 + $0x8] sm:$0xff] %v2004
        %2069 = vst [vmem:[#allocation2 + $0x10] sm:$0xff] %v2005
        %2070 = vst [vmem:[#allocation2 + $0x18] sm:$0xff] %v2006
        %2071 = vst [vmem:[#allocation2 + $0x20] sm:$0xff] %v2007
        %2072 = vst [vmem:[#allocation2 + $0x28] sm:$0xff] %v2008
        %2073 = vst [vmem:[#allocation2 + $0x30] sm:$0xff] %v2009
        %2074 = vst [vmem:[#allocation2 + $0x38] sm:$0xff] %v2010
        %2075 = vst [vmem:[#allocation2 + $0x40] sm:$0xff] %v2011
        %2076 = vst [vmem:[#allocation2 + $0x48] sm:$0xff] %v2012
        %2077 = vst [vmem:[#allocation2 + $0x50] sm:$0xff] %v2013
        %2078 = vst [vmem:[#allocation2 + $0x58] sm:$0xff] %v2014
        %2079 = vst [vmem:[#allocation2 + $0x60] sm:$0xff] %v2015
        %2080 = vst [vmem:[#allocation2 + $0x68] sm:$0xff] %v2016
        %2081 = vst [vmem:[#allocation2 + $0x70] sm:$0xff] %v2017
        %2082 = vst [vmem:[#allocation2 + $0x78] sm:$0xff] %v2018
        %2083 = vst [vmem:[#allocation2 + $0x80] sm:$0xff] %v2019
        %2084 = vst [vmem:[#allocation2 + $0x88] sm:$0xff] %v2020
        %2085 = vst [vmem:[#allocation2 + $0x90] sm:$0xff] %v2021
        %2086 = vst [vmem:[#allocation2 + $0x98] sm:$0xff] %v2022
        %2087 = vst [vmem:[#allocation2 + $0xa0] sm:$0xff] %v2023
        %2088 = vst [vmem:[#allocation2 + $0xa8] sm:$0xff] %v2024
        %2089 = vst [vmem:[#allocation2 + $0xb0] sm:$0xff] %v2025
        %2090 = vst [vmem:[#allocation2 + $0xb8] sm:$0xff] %v2026
        %2091 = vst [vmem:[#allocation2 + $0xc0] sm:$0xff] %v2027
        %2092 = vst [vmem:[#allocation2 + $0xc8] sm:$0xff] %v2028
        %2093 = vst [vmem:[#allocation2 + $0xd0] sm:$0xff] %v2029
        %2094 = vst [vmem:[#allocation2 + $0xd8] sm:$0xff] %v2030
        %2095 = vst [vmem:[#allocation2 + $0xe0] sm:$0xff] %v2031
        %2096 = vst [vmem:[#allocation2 + $0xe8] sm:$0xff] %v2032
        %2097 = vst [vmem:[#allocation2 + $0xf0] sm:$0xff] %v2033
        %2098 = vst [vmem:[#allocation2 + $0xf8] sm:$0xff] %v2034
        %2099 = vst [vmem:[#allocation2 + $0x100] sm:$0xff] %v2035
        %2100 = vst [vmem:[#allocation2 + $0x108] sm:$0xff] %v2036
        %2101 = vst [vmem:[#allocation2 + $0x110] sm:$0xff] %v2037
        %2102 = vst [vmem:[#allocation2 + $0x118] sm:$0xff] %v2038
        %2103 = vst [vmem:[#allocation2 + $0x120] sm:$0xff] %v2039
        %2104 = vst [vmem:[#allocation2 + $0x128] sm:$0xff] %v2040
        %2105 = vst [vmem:[#allocation2 + $0x130] sm:$0xff] %v2041
        %2106 = vst [vmem:[#allocation2 + $0x138] sm:$0xff] %v2042
        %2107 = vst [vmem:[#allocation2 + $0x140] sm:$0xff] %v2043
        %2108 = vst [vmem:[#allocation2 + $0x148] sm:$0xff] %v2044
        %2109 = vst [vmem:[#allocation2 + $0x150] sm:$0xff] %v2045
        %2110 = vst [vmem:[#allocation2 + $0x158] sm:$0xff] %v2046
        %2111 = vst [vmem:[#allocation2 + $0x160] sm:$0xff] %v2047
        %2112 = vst [vmem:[#allocation2 + $0x168] sm:$0xff] %v2048
        %2113 = vst [vmem:[#allocation2 + $0x170] sm:$0xff] %v2049
        %2114 = vst [vmem:[#allocation2 + $0x178] sm:$0xff] %v2050
        %2115 = vst [vmem:[#allocation2 + $0x180] sm:$0xff] %v2051
        %2116 = vst [vmem:[#allocation2 + $0x188] sm:$0xff] %v2052
        %2117 = vst [vmem:[#allocation2 + $0x190] sm:$0xff] %v2053
        %2118 = vst [vmem:[#allocation2 + $0x198] sm:$0xff] %v2054
        %2119 = vst [vmem:[#allocation2 + $0x1a0] sm:$0xff] %v2055
        %2120 = vst [vmem:[#allocation2 + $0x1a8] sm:$0xff] %v2056
        %2121 = vst [vmem:[#allocation2 + $0x1b0] sm:$0xff] %v2057
        %2122 = vst [vmem:[#allocation2 + $0x1b8] sm:$0xff] %v2058
        %2123 = vst [vmem:[#allocation2 + $0x1c0] sm:$0xff] %v2059
        %2124 = vst [vmem:[#allocation2 + $0x1c8] sm:$0xff] %v2060
        %2125 = vst [vmem:[#allocation2 + $0x1d0] sm:$0xff] %v2061
        %2126 = vst [vmem:[#allocation2 + $0x1d8] sm:$0xff] %v2062
        %2127 = vst [vmem:[#allocation2 + $0x1e0] sm:$0xff] %v2063
        %2128 = vst [vmem:[#allocation2 + $0x1e8] sm:$0xff] %v2064
        %2129 = vst [vmem:[#allocation2 + $0x1f0] sm:$0xff] %v2065
        %2130 = vst [vmem:[#allocation2 + $0x1f8] sm:$0xff] %v2066
        %v2131 = vld [vmem:[#allocation2] sm:$0xff]
        %v2132 = vld [vmem:[#allocation2 + $0x8] sm:$0xff]
        %v2133 = vld [vmem:[#allocation2 + $0x10] sm:$0xff]
        %v2134 = vld [vmem:[#allocation2 + $0x18] sm:$0xff]
        %v2135 = vld [vmem:[#allocation2 + $0x20] sm:$0xff]
        %v2136 = vld [vmem:[#allocation2 + $0x28] sm:$0xff]
        %v2137 = vld [vmem:[#allocation2 + $0x30] sm:$0xff]
        %v2138 = vld [vmem:[#allocation2 + $0x38] sm:$0xff]
        %v2139 = vld [vmem:[#allocation2 + $0x40] sm:$0xff]
        %v2140 = vld [vmem:[#allocation2 + $0x48] sm:$0xff]
        %v2141 = vld [vmem:[#allocation2 + $0x50] sm:$0xff]
        %v2142 = vld [vmem:[#allocation2 + $0x58] sm:$0xff]
        %v2143 = vld [vmem:[#allocation2 + $0x60] sm:$0xff]
        %v2144 = vld [vmem:[#allocation2 + $0x68] sm:$0xff]
        %v2145 = vld [vmem:[#allocation2 + $0x70] sm:$0xff]
        %v2146 = vld [vmem:[#allocation2 + $0x78] sm:$0xff]
        %v2147 = vld [vmem:[#allocation2 + $0x80] sm:$0xff]
        %v2148 = vld [vmem:[#allocation2 + $0x88] sm:$0xff]
        %v2149 = vld [vmem:[#allocation2 + $0x90] sm:$0xff]
        %v2150 = vld [vmem:[#allocation2 + $0x98] sm:$0xff]
        %v2151 = vld [vmem:[#allocation2 + $0xa0] sm:$0xff]
        %v2152 = vld [vmem:[#allocation2 + $0xa8] sm:$0xff]
        %v2153 = vld [vmem:[#allocation2 + $0xb0] sm:$0xff]
        %v2154 = vld [vmem:[#allocation2 + $0xb8] sm:$0xff]
        %v2155 = vld [vmem:[#allocation2 + $0xc0] sm:$0xff]
        %v2156 = vld [vmem:[#allocation2 + $0xc8] sm:$0xff]
        %v2157 = vld [vmem:[#allocation2 + $0xd0] sm:$0xff]
        %v2158 = vld [vmem:[#allocation2 + $0xd8] sm:$0xff]
        %v2159 = vld [vmem:[#allocation2 + $0xe0] sm:$0xff]
        %v2160 = vld [vmem:[#allocation2 + $0xe8] sm:$0xff]
        %v2161 = vld [vmem:[#allocation2 + $0xf0] sm:$0xff]
        %v2162 = vld [vmem:[#allocation2 + $0xf8] sm:$0xff]
        %v2163 = vld [vmem:[#allocation2 + $0x100] sm:$0xff]
        %v2164 = vld [vmem:[#allocation2 + $0x108] sm:$0xff]
        %v2165 = vld [vmem:[#allocation2 + $0x110] sm:$0xff]
        %v2166 = vld [vmem:[#allocation2 + $0x118] sm:$0xff]
        %v2167 = vld [vmem:[#allocation2 + $0x120] sm:$0xff]
        %v2168 = vld [vmem:[#allocation2 + $0x128] sm:$0xff]
        %v2169 = vld [vmem:[#allocation2 + $0x130] sm:$0xff]
        %v2170 = vld [vmem:[#allocation2 + $0x138] sm:$0xff]
        %v2171 = vld [vmem:[#allocation2 + $0x140] sm:$0xff]
        %v2172 = vld [vmem:[#allocation2 + $0x148] sm:$0xff]
        %v2173 = vld [vmem:[#allocation2 + $0x150] sm:$0xff]
        %v2174 = vld [vmem:[#allocation2 + $0x158] sm:$0xff]
        %v2175 = vld [vmem:[#allocation2 + $0x160] sm:$0xff]
        %v2176 = vld [vmem:[#allocation2 + $0x168] sm:$0xff]
        %v2177 = vld [vmem:[#allocation2 + $0x170] sm:$0xff]
        %v2178 = vld [vmem:[#allocation2 + $0x178] sm:$0xff]
        %v2179 = vld [vmem:[#allocation2 + $0x180] sm:$0xff]
        %v2180 = vld [vmem:[#allocation2 + $0x188] sm:$0xff]
        %v2181 = vld [vmem:[#allocation2 + $0x190] sm:$0xff]
        %v2182 = vld [vmem:[#allocation2 + $0x198] sm:$0xff]
        %v2183 = vld [vmem:[#allocation2 + $0x1a0] sm:$0xff]
        %v2184 = vld [vmem:[#allocation2 + $0x1a8] sm:$0xff]
        %v2185 = vld [vmem:[#allocation2 + $0x1b0] sm:$0xff]
        %v2186 = vld [vmem:[#allocation2 + $0x1b8] sm:$0xff]
        %v2187 = vld [vmem:[#allocation2 + $0x1c0] sm:$0xff]
        %v2188 = vld [vmem:[#allocation2 + $0x1c8] sm:$0xff]
        %v2189 = vld [vmem:[#allocation2 + $0x1d0] sm:$0xff]
        %v2190 = vld [vmem:[#allocation2 + $0x1d8] sm:$0xff]
        %v2191 = vld [vmem:[#allocation2 + $0x1e0] sm:$0xff]
        %v2192 = vld [vmem:[#allocation2 + $0x1e8] sm:$0xff]
        %v2193 = vld [vmem:[#allocation2 + $0x1f0] sm:$0xff]
        %v2194 = vld [vmem:[#allocation2 + $0x1f8] sm:$0xff]
        %v2195 = vld [vmem:[#allocation9] sm:$0xf]
        %v2196 = vld [vmem:[#allocation9 + $0x4] sm:$0xf]
        %v2197 = vld [vmem:[#allocation9 + $0x8] sm:$0xf]
        %v2198 = vld [vmem:[#allocation9 + $0xc] sm:$0xf]
        %v2199 = vld [vmem:[#allocation9 + $0x10] sm:$0xf]
        %v2200 = vld [vmem:[#allocation9 + $0x14] sm:$0xf]
        %v2201 = vld [vmem:[#allocation9 + $0x18] sm:$0xf]
        %v2202 = vld [vmem:[#allocation9 + $0x1c] sm:$0xf]
        %v2203 = vld [vmem:[#allocation9 + $0x20] sm:$0xf]
        %v2204 = vld [vmem:[#allocation9 + $0x24] sm:$0xf]
        %v2205 = vld [vmem:[#allocation9 + $0x28] sm:$0xf]
        %v2206 = vld [vmem:[#allocation9 + $0x2c] sm:$0xf]
        %v2207 = vld [vmem:[#allocation9 + $0x30] sm:$0xf]
        %v2208 = vld [vmem:[#allocation9 + $0x34] sm:$0xf]
        %v2209 = vld [vmem:[#allocation9 + $0x38] sm:$0xf]
        %v2210 = vld [vmem:[#allocation9 + $0x3c] sm:$0xf]
        %v2211 = vld [vmem:[#allocation9 + $0x40] sm:$0xf]
        %v2212 = vld [vmem:[#allocation9 + $0x44] sm:$0xf]
        %v2213 = vld [vmem:[#allocation9 + $0x48] sm:$0xf]
        %v2214 = vld [vmem:[#allocation9 + $0x4c] sm:$0xf]
        %v2215 = vld [vmem:[#allocation9 + $0x50] sm:$0xf]
        %v2216 = vld [vmem:[#allocation9 + $0x54] sm:$0xf]
        %v2217 = vld [vmem:[#allocation9 + $0x58] sm:$0xf]
        %v2218 = vld [vmem:[#allocation9 + $0x5c] sm:$0xf]
        %v2219 = vld [vmem:[#allocation9 + $0x60] sm:$0xf]
        %v2220 = vld [vmem:[#allocation9 + $0x64] sm:$0xf]
        %v2221 = vld [vmem:[#allocation9 + $0x68] sm:$0xf]
        %v2222 = vld [vmem:[#allocation9 + $0x6c] sm:$0xf]
        %v2223 = vld [vmem:[#allocation9 + $0x70] sm:$0xf]
        %v2224 = vld [vmem:[#allocation9 + $0x74] sm:$0xf]
        %v2225 = vld [vmem:[#allocation9 + $0x78] sm:$0xf]
        %v2226 = vld [vmem:[#allocation9 + $0x7c] sm:$0xf]
        %v2227 = vld [vmem:[#allocation9 + $0x80] sm:$0xf]
        %v2228 = vld [vmem:[#allocation9 + $0x84] sm:$0xf]
        %v2229 = vld [vmem:[#allocation9 + $0x88] sm:$0xf]
        %v2230 = vld [vmem:[#allocation9 + $0x8c] sm:$0xf]
        %v2231 = vld [vmem:[#allocation9 + $0x90] sm:$0xf]
        %v2232 = vld [vmem:[#allocation9 + $0x94] sm:$0xf]
        %v2233 = vld [vmem:[#allocation9 + $0x98] sm:$0xf]
        %v2234 = vld [vmem:[#allocation9 + $0x9c] sm:$0xf]
        %v2235 = vld [vmem:[#allocation9 + $0xa0] sm:$0xf]
        %v2236 = vld [vmem:[#allocation9 + $0xa4] sm:$0xf]
        %v2237 = vld [vmem:[#allocation9 + $0xa8] sm:$0xf]
        %v2238 = vld [vmem:[#allocation9 + $0xac] sm:$0xf]
        %v2239 = vld [vmem:[#allocation9 + $0xb0] sm:$0xf]
        %v2240 = vld [vmem:[#allocation9 + $0xb4] sm:$0xf]
        %v2241 = vld [vmem:[#allocation9 + $0xb8] sm:$0xf]
        %v2242 = vld [vmem:[#allocation9 + $0xbc] sm:$0xf]
        %v2243 = vld [vmem:[#allocation9 + $0xc0] sm:$0xf]
        %v2244 = vld [vmem:[#allocation9 + $0xc4] sm:$0xf]
        %v2245 = vld [vmem:[#allocation9 + $0xc8] sm:$0xf]
        %v2246 = vld [vmem:[#allocation9 + $0xcc] sm:$0xf]
        %v2247 = vld [vmem:[#allocation9 + $0xd0] sm:$0xf]
        %v2248 = vld [vmem:[#allocation9 + $0xd4] sm:$0xf]
        %v2249 = vld [vmem:[#allocation9 + $0xd8] sm:$0xf]
        %v2250 = vld [vmem:[#allocation9 + $0xdc] sm:$0xf]
        %v2251 = vld [vmem:[#allocation9 + $0xe0] sm:$0xf]
        %v2252 = vld [vmem:[#allocation9 + $0xe4] sm:$0xf]
        %v2253 = vld [vmem:[#allocation9 + $0xe8] sm:$0xf]
        %v2254 = vld [vmem:[#allocation9 + $0xec] sm:$0xf]
        %v2255 = vld [vmem:[#allocation9 + $0xf0] sm:$0xf]
        %v2256 = vld [vmem:[#allocation9 + $0xf4] sm:$0xf]
        %v2257 = vld [vmem:[#allocation9 + $0xf8] sm:$0xf]
        %v2258 = vld [vmem:[#allocation9 + $0xfc] sm:$0xf]
        %v2259 = vld [vmem:[#allocation6 + $0x2] sm:$0x1]
        %v2260 = vlaneseq
        %v2261 = vshrl.u32 %v2260, 7
        %v2262 = vsub.s32 0, %v2261
        %v2263 = vrot.slane %v2259, %v2262
        %v2328 = vunpack.c.l.b16 %v2195
        %v2329 = vunpack.c.l.b16 %v2196
        %v2330 = vunpack.c.l.b16 %v2197
        %v2331 = vunpack.c.l.b16 %v2198
        %v2332 = vunpack.c.l.b16 %v2199
        %v2333 = vunpack.c.l.b16 %v2200
        %v2334 = vunpack.c.l.b16 %v2201
        %v2335 = vunpack.c.l.b16 %v2202
        %v2336 = vunpack.c.l.b16 %v2203
        %v2337 = vunpack.c.l.b16 %v2204
        %v2338 = vunpack.c.l.b16 %v2205
        %v2339 = vunpack.c.l.b16 %v2206
        %v2340 = vunpack.c.l.b16 %v2207
        %v2341 = vunpack.c.l.b16 %v2208
        %v2342 = vunpack.c.l.b16 %v2209
        %v2343 = vunpack.c.l.b16 %v2210
        %v2344 = vunpack.c.l.b16 %v2211
        %v2345 = vunpack.c.l.b16 %v2212
        %v2346 = vunpack.c.l.b16 %v2213
        %v2347 = vunpack.c.l.b16 %v2214
        %v2348 = vunpack.c.l.b16 %v2215
        %v2349 = vunpack.c.l.b16 %v2216
        %v2350 = vunpack.c.l.b16 %v2217
        %v2351 = vunpack.c.l.b16 %v2218
        %v2352 = vunpack.c.l.b16 %v2219
        %v2353 = vunpack.c.l.b16 %v2220
        %v2354 = vunpack.c.l.b16 %v2221
        %v2355 = vunpack.c.l.b16 %v2222
        %v2356 = vunpack.c.l.b16 %v2223
        %v2357 = vunpack.c.l.b16 %v2224
        %v2358 = vunpack.c.l.b16 %v2225
        %v2359 = vunpack.c.l.b16 %v2226
        %v2360 = vunpack.c.l.b16 %v2227
        %v2361 = vunpack.c.l.b16 %v2228
        %v2362 = vunpack.c.l.b16 %v2229
        %v2363 = vunpack.c.l.b16 %v2230
        %v2364 = vunpack.c.l.b16 %v2231
        %v2365 = vunpack.c.l.b16 %v2232
        %v2366 = vunpack.c.l.b16 %v2233
        %v2367 = vunpack.c.l.b16 %v2234
        %v2368 = vunpack.c.l.b16 %v2235
        %v2369 = vunpack.c.l.b16 %v2236
        %v2370 = vunpack.c.l.b16 %v2237
        %v2371 = vunpack.c.l.b16 %v2238
        %v2372 = vunpack.c.l.b16 %v2239
        %v2373 = vunpack.c.l.b16 %v2240
        %v2374 = vunpack.c.l.b16 %v2241
        %v2375 = vunpack.c.l.b16 %v2242
        %v2376 = vunpack.c.l.b16 %v2243
        %v2377 = vunpack.c.l.b16 %v2244
        %v2378 = vunpack.c.l.b16 %v2245
        %v2379 = vunpack.c.l.b16 %v2246
        %v2380 = vunpack.c.l.b16 %v2247
        %v2381 = vunpack.c.l.b16 %v2248
        %v2382 = vunpack.c.l.b16 %v2249
        %v2383 = vunpack.c.l.b16 %v2250
        %v2384 = vunpack.c.l.b16 %v2251
        %v2385 = vunpack.c.l.b16 %v2252
        %v2386 = vunpack.c.l.b16 %v2253
        %v2387 = vunpack.c.l.b16 %v2254
        %v2388 = vunpack.c.l.b16 %v2255
        %v2389 = vunpack.c.l.b16 %v2256
        %v2390 = vunpack.c.l.b16 %v2257
        %v2391 = vunpack.c.l.b16 %v2258
        %v2392 = vpack.c.b16 %v2329, %v2328
        %v2393 = vpack.c.b16 %v2331, %v2330
        %v2394 = vpack.c.b16 %v2333, %v2332
        %v2395 = vpack.c.b16 %v2335, %v2334
        %v2396 = vpack.c.b16 %v2337, %v2336
        %v2397 = vpack.c.b16 %v2339, %v2338
        %v2398 = vpack.c.b16 %v2341, %v2340
        %v2399 = vpack.c.b16 %v2343, %v2342
        %v2400 = vpack.c.b16 %v2345, %v2344
        %v2401 = vpack.c.b16 %v2347, %v2346
        %v2402 = vpack.c.b16 %v2349, %v2348
        %v2403 = vpack.c.b16 %v2351, %v2350
        %v2404 = vpack.c.b16 %v2353, %v2352
        %v2405 = vpack.c.b16 %v2355, %v2354
        %v2406 = vpack.c.b16 %v2357, %v2356
        %v2407 = vpack.c.b16 %v2359, %v2358
        %v2408 = vpack.c.b16 %v2361, %v2360
        %v2409 = vpack.c.b16 %v2363, %v2362
        %v2410 = vpack.c.b16 %v2365, %v2364
        %v2411 = vpack.c.b16 %v2367, %v2366
        %v2412 = vpack.c.b16 %v2369, %v2368
        %v2413 = vpack.c.b16 %v2371, %v2370
        %v2414 = vpack.c.b16 %v2373, %v2372
        %v2415 = vpack.c.b16 %v2375, %v2374
        %v2416 = vpack.c.b16 %v2377, %v2376
        %v2417 = vpack.c.b16 %v2379, %v2378
        %v2418 = vpack.c.b16 %v2381, %v2380
        %v2419 = vpack.c.b16 %v2383, %v2382
        %v2420 = vpack.c.b16 %v2385, %v2384
        %v2421 = vpack.c.b16 %v2387, %v2386
        %v2422 = vpack.c.b16 %v2389, %v2388
        %v2423 = vpack.c.b16 %v2391, %v2390
        %2456 = vmatprep.subr.bf16.mxu0 0
        %2457 = vmatpush1.bf16.msra.mxu0 %v2392
        %2458 = vmatprep.subr.bf16.mxu0 0
        %2459 = vmatpush1.bf16.msra.mxu0 %v2393
        %2460 = vmatprep.subr.bf16.mxu0 0
        %2461 = vmatpush1.bf16.msra.mxu0 %v2394
        %2462 = vmatprep.subr.bf16.mxu0 0
        %2463 = vmatpush1.bf16.msra.mxu0 %v2395
        %2464 = vmatprep.subr.bf16.mxu0 0
        %2465 = vmatpush1.bf16.msra.mxu0 %v2396
        %2466 = vmatprep.subr.bf16.mxu0 0
        %2467 = vmatpush1.bf16.msra.mxu0 %v2397
        %2468 = vmatprep.subr.bf16.mxu0 0
        %2469 = vmatpush1.bf16.msra.mxu0 %v2398
        %2470 = vmatprep.subr.bf16.mxu0 0
        %2471 = vmatpush1.bf16.msra.mxu0 %v2399
        %2472 = vmatprep.subr.bf16.mxu0 0
        %2473 = vmatpush1.bf16.msra.mxu0 %v2400
        %2474 = vmatprep.subr.bf16.mxu0 0
        %2475 = vmatpush1.bf16.msra.mxu0 %v2401
        %2476 = vmatprep.subr.bf16.mxu0 0
        %2477 = vmatpush1.bf16.msra.mxu0 %v2402
        %2478 = vmatprep.subr.bf16.mxu0 0
        %2479 = vmatpush1.bf16.msra.mxu0 %v2403
        %2480 = vmatprep.subr.bf16.mxu0 0
        %2481 = vmatpush1.bf16.msra.mxu0 %v2404
        %2482 = vmatprep.subr.bf16.mxu0 0
        %2483 = vmatpush1.bf16.msra.mxu0 %v2405
        %2484 = vmatprep.subr.bf16.mxu0 0
        %2485 = vmatpush1.bf16.msra.mxu0 %v2406
        %2486 = vmatprep.subr.bf16.mxu0 0
        %2487 = vmatpush1.bf16.msra.mxu0 %v2407
        %2488 = vmatprep.mubr.bf16.mxu0 %v2132
        %2489 = vmatmul.mubr.bf16.gmra.mrb[0].mxu0 %v2131
        %v2490 = vpop.f32.mrb[0].mxu0
        %v2491 = vadd.f32 %v2263, %v2490
        %v2492 = vpop.f32.mrb[0].mxu0
        %v2493 = vpop.f32.mrb[0].mxu0
        %v2494 = vadd.f32 %v2263, %v2493
        %v2495 = vpop.f32.mrb[0].mxu0
        %2496 = vmatprep.mubr.bf16.mxu0 %v2136
        %2497 = vmatmul.mubr.bf16.gmra.mrb[0].mxu0 %v2135
        %v2498 = vpop.f32.mrb[0].mxu0
        %v2499 = vadd.f32 %v2263, %v2498
        %v2500 = vpop.f32.mrb[0].mxu0
        %v2501 = vpop.f32.mrb[0].mxu0
        %v2502 = vadd.f32 %v2263, %v2501
        %v2503 = vpop.f32.mrb[0].mxu0
        %2504 = vmatprep.mubr.bf16.mxu0 %v2140
        %2505 = vmatmul.mubr.bf16.gmra.mrb[0].mxu0 %v2139
        %v2506 = vpop.f32.mrb[0].mxu0
        %v2507 = vadd.f32 %v2263, %v2506
        %v2508 = vpop.f32.mrb[0].mxu0
        %v2509 = vpop.f32.mrb[0].mxu0
        %v2510 = vadd.f32 %v2263, %v2509
        %v2511 = vpop.f32.mrb[0].mxu0
        %2512 = vmatprep.mubr.bf16.mxu0 %v2144
        %2513 = vmatmul.mubr.bf16.gmra.mrb[0].mxu0 %v2143
        %v2514 = vpop.f32.mrb[0].mxu0
        %v2515 = vadd.f32 %v2263, %v2514
        %v2516 = vpop.f32.mrb[0].mxu0
        %v2517 = vpop.f32.mrb[0].mxu0
        %v2518 = vadd.f32 %v2263, %v2517
        %v2519 = vpop.f32.mrb[0].mxu0
        %2520 = vmatprep.mubr.bf16.mxu0 %v2148
        %2521 = vmatmul.mubr.bf16.gmra.mrb[0].mxu0 %v2147
        %v2522 = vpop.f32.mrb[0].mxu0
        %v2523 = vadd.f32 %v2263, %v2522
        %v2524 = vpop.f32.mrb[0].mxu0
        %v2525 = vpop.f32.mrb[0].mxu0
        %v2526 = vadd.f32 %v2263, %v2525
        %v2527 = vpop.f32.mrb[0].mxu0
        %2528 = vmatprep.mubr.bf16.mxu0 %v2152
        %2529 = vmatmul.mubr.bf16.gmra.mrb[0].mxu0 %v2151
        %v2530 = vpop.f32.mrb[0].mxu0
        %v2531 = vadd.f32 %v2263, %v2530
        %v2532 = vpop.f32.mrb[0].mxu0
        %v2533 = vpop.f32.mrb[0].mxu0
        %v2534 = vadd.f32 %v2263, %v2533
        %v2535 = vpop.f32.mrb[0].mxu0
        %2536 = vmatprep.mubr.bf16.mxu0 %v2156
        %2537 = vmatmul.mubr.bf16.gmra.mrb[0].mxu0 %v2155
        %v2538 = vpop.f32.mrb[0].mxu0
        %v2539 = vadd.f32 %v2263, %v2538
        %v2540 = vpop.f32.mrb[0].mxu0
        %v2541 = vpop.f32.mrb[0].mxu0
        %v2542 = vadd.f32 %v2263, %v2541
        %v2543 = vpop.f32.mrb[0].mxu0
        %2544 = vmatprep.mubr.bf16.mxu0 %v2160
        %2545 = vmatmul.mubr.bf16.gmra.mrb[0].mxu0 %v2159
        %v2546 = vpop.f32.mrb[0].mxu0
        %v2547 = vadd.f32 %v2263, %v2546
        %v2548 = vpop.f32.mrb[0].mxu0
        %v2549 = vpop.f32.mrb[0].mxu0
        %v2550 = vadd.f32 %v2263, %v2549
        %v2551 = vpop.f32.mrb[0].mxu0
        %2552 = vmatprep.mubr.bf16.mxu0 %v2164
        %2553 = vmatmul.mubr.bf16.gmra.mrb[0].mxu0 %v2163
        %v2554 = vpop.f32.mrb[0].mxu0
        %v2555 = vadd.f32 %v2263, %v2554
        %v2556 = vpop.f32.mrb[0].mxu0
        %v2557 = vpop.f32.mrb[0].mxu0
        %v2558 = vadd.f32 %v2263, %v2557
        %v2559 = vpop.f32.mrb[0].mxu0
        %2560 = vmatprep.mubr.bf16.mxu0 %v2168
        %2561 = vmatmul.mubr.bf16.gmra.mrb[0].mxu0 %v2167
        %v2562 = vpop.f32.mrb[0].mxu0
        %v2563 = vadd.f32 %v2263, %v2562
        %v2564 = vpop.f32.mrb[0].mxu0
        %v2565 = vpop.f32.mrb[0].mxu0
        %v2566 = vadd.f32 %v2263, %v2565
        %v2567 = vpop.f32.mrb[0].mxu0
        %2568 = vmatprep.mubr.bf16.mxu0 %v2172
        %2569 = vmatmul.mubr.bf16.gmra.mrb[0].mxu0 %v2171
        %v2570 = vpop.f32.mrb[0].mxu0
        %v2571 = vadd.f32 %v2263, %v2570
        %v2572 = vpop.f32.mrb[0].mxu0
        %v2573 = vpop.f32.mrb[0].mxu0
        %v2574 = vadd.f32 %v2263, %v2573
        %v2575 = vpop.f32.mrb[0].mxu0
        %2576 = vmatprep.mubr.bf16.mxu0 %v2176
        %2577 = vmatmul.mubr.bf16.gmra.mrb[0].mxu0 %v2175
        %v2578 = vpop.f32.mrb[0].mxu0
        %v2579 = vadd.f32 %v2263, %v2578
        %v2580 = vpop.f32.mrb[0].mxu0
        %v2581 = vpop.f32.mrb[0].mxu0
        %v2582 = vadd.f32 %v2263, %v2581
        %v2583 = vpop.f32.mrb[0].mxu0
        %2584 = vmatprep.mubr.bf16.mxu0 %v2180
        %2585 = vmatmul.mubr.bf16.gmra.mrb[0].mxu0 %v2179
        %v2586 = vpop.f32.mrb[0].mxu0
        %v2587 = vadd.f32 %v2263, %v2586
        %v2588 = vpop.f32.mrb[0].mxu0
        %v2589 = vpop.f32.mrb[0].mxu0
        %v2590 = vadd.f32 %v2263, %v2589
        %v2591 = vpop.f32.mrb[0].mxu0
        %2592 = vmatprep.mubr.bf16.mxu0 %v2184
        %2593 = vmatmul.mubr.bf16.gmra.mrb[0].mxu0 %v2183
        %v2594 = vpop.f32.mrb[0].mxu0
        %v2595 = vadd.f32 %v2263, %v2594
        %v2596 = vpop.f32.mrb[0].mxu0
        %v2597 = vpop.f32.mrb[0].mxu0
        %v2598 = vadd.f32 %v2263, %v2597
        %v2599 = vpop.f32.mrb[0].mxu0
        %2600 = vmatprep.mubr.bf16.mxu0 %v2188
        %2601 = vmatmul.mubr.bf16.gmra.mrb[0].mxu0 %v2187
        %v2602 = vpop.f32.mrb[0].mxu0
        %v2603 = vadd.f32 %v2263, %v2602
        %v2604 = vpop.f32.mrb[0].mxu0
        %v2605 = vpop.f32.mrb[0].mxu0
        %v2606 = vadd.f32 %v2263, %v2605
        %v2607 = vpop.f32.mrb[0].mxu0
        %2608 = vmatprep.mubr.bf16.mxu0 %v2192
        %2609 = vmatmul.mubr.bf16.gmra.mrb[0].mxu0 %v2191
        %v2610 = vpop.f32.mrb[0].mxu0
        %v2611 = vadd.f32 %v2263, %v2610
        %v2612 = vpop.f32.mrb[0].mxu0
        %v2613 = vpop.f32.mrb[0].mxu0
        %v2614 = vadd.f32 %v2263, %v2613
        %v2615 = vpop.f32.mrb[0].mxu0
        %2616 = vdwg.mxu0
        %2617 = vmatprep.subr.bf16.mxu0 0
        %2618 = vmatpush1.bf16.msra.mxu0 %v2408
        %2619 = vmatprep.subr.bf16.mxu0 0
        %2620 = vmatpush1.bf16.msra.mxu0 %v2409
        %2621 = vmatprep.subr.bf16.mxu0 0
        %2622 = vmatpush1.bf16.msra.mxu0 %v2410
        %2623 = vmatprep.subr.bf16.mxu0 0
        %2624 = vmatpush1.bf16.msra.mxu0 %v2411
        %2625 = vmatprep.subr.bf16.mxu0 0
        %2626 = vmatpush1.bf16.msra.mxu0 %v2412
        %2627 = vmatprep.subr.bf16.mxu0 0
        %2628 = vmatpush1.bf16.msra.mxu0 %v2413
        %2629 = vmatprep.subr.bf16.mxu0 0
        %2630 = vmatpush1.bf16.msra.mxu0 %v2414
        %2631 = vmatprep.subr.bf16.mxu0 0
        %2632 = vmatpush1.bf16.msra.mxu0 %v2415
        %2633 = vmatprep.subr.bf16.mxu0 0
        %2634 = vmatpush1.bf16.msra.mxu0 %v2416
        %2635 = vmatprep.subr.bf16.mxu0 0
        %2636 = vmatpush1.bf16.msra.mxu0 %v2417
        %2637 = vmatprep.subr.bf16.mxu0 0
        %2638 = vmatpush1.bf16.msra.mxu0 %v2418
        %2639 = vmatprep.subr.bf16.mxu0 0
        %2640 = vmatpush1.bf16.msra.mxu0 %v2419
        %2641 = vmatprep.subr.bf16.mxu0 0
        %2642 = vmatpush1.bf16.msra.mxu0 %v2420
        %2643 = vmatprep.subr.bf16.mxu0 0
        %2644 = vmatpush1.bf16.msra.mxu0 %v2421
        %2645 = vmatprep.subr.bf16.mxu0 0
        %2646 = vmatpush1.bf16.msra.mxu0 %v2422
        %2647 = vmatprep.subr.bf16.mxu0 0
        %2648 = vmatpush1.bf16.msra.mxu0 %v2423
        %2649 = vmatprep.mubr.bf16.mxu0 %v2134
        %2650 = vmatmul.mubr.bf16.gmra.mrb[0].mxu0 %v2133
        %v2651 = vpop.f32.mrb[0].mxu0
        %v2652 = vadd.f32 %v2491, %v2651
        %v2653 = vpop.f32.mrb[0].mxu0
        %v2654 = vpop.f32.mrb[0].mxu0
        %v2655 = vadd.f32 %v2494, %v2654
        %v2656 = vpop.f32.mrb[0].mxu0
        %2657 = vmatprep.mubr.bf16.mxu0 %v2138
        %2658 = vmatmul.mubr.bf16.gmra.mrb[0].mxu0 %v2137
        %v2659 = vpop.f32.mrb[0].mxu0
        %v2660 = vadd.f32 %v2499, %v2659
        %v2661 = vpop.f32.mrb[0].mxu0
        %v2662 = vpop.f32.mrb[0].mxu0
        %v2663 = vadd.f32 %v2502, %v2662
        %v2664 = vpop.f32.mrb[0].mxu0
        %2665 = vmatprep.mubr.bf16.mxu0 %v2142
        %2666 = vmatmul.mubr.bf16.gmra.mrb[0].mxu0 %v2141
        %v2667 = vpop.f32.mrb[0].mxu0
        %v2668 = vadd.f32 %v2507, %v2667
        %v2669 = vpop.f32.mrb[0].mxu0
        %v2670 = vpop.f32.mrb[0].mxu0
        %v2671 = vadd.f32 %v2510, %v2670
        %v2672 = vpop.f32.mrb[0].mxu0
        %2673 = vmatprep.mubr.bf16.mxu0 %v2146
        %2674 = vmatmul.mubr.bf16.gmra.mrb[0].mxu0 %v2145
        %v2675 = vpop.f32.mrb[0].mxu0
        %v2676 = vadd.f32 %v2515, %v2675
        %v2677 = vpop.f32.mrb[0].mxu0
        %v2678 = vpop.f32.mrb[0].mxu0
        %v2679 = vadd.f32 %v2518, %v2678
        %v2680 = vpop.f32.mrb[0].mxu0
        %2681 = vmatprep.mubr.bf16.mxu0 %v2150
        %2682 = vmatmul.mubr.bf16.gmra.mrb[0].mxu0 %v2149
        %v2683 = vpop.f32.mrb[0].mxu0
        %v2684 = vadd.f32 %v2523, %v2683
        %v2685 = vpop.f32.mrb[0].mxu0
        %v2686 = vpop.f32.mrb[0].mxu0
        %v2687 = vadd.f32 %v2526, %v2686
        %v2688 = vpop.f32.mrb[0].mxu0
        %2689 = vmatprep.mubr.bf16.mxu0 %v2154
        %2690 = vmatmul.mubr.bf16.gmra.mrb[0].mxu0 %v2153
        %v2691 = vpop.f32.mrb[0].mxu0
        %v2692 = vadd.f32 %v2531, %v2691
        %v2693 = vpop.f32.mrb[0].mxu0
        %v2694 = vpop.f32.mrb[0].mxu0
        %v2695 = vadd.f32 %v2534, %v2694
        %v2696 = vpop.f32.mrb[0].mxu0
        %2697 = vmatprep.mubr.bf16.mxu0 %v2158
        %2698 = vmatmul.mubr.bf16.gmra.mrb[0].mxu0 %v2157
        %v2699 = vpop.f32.mrb[0].mxu0
        %v2700 = vadd.f32 %v2539, %v2699
        %v2701 = vpop.f32.mrb[0].mxu0
        %v2702 = vpop.f32.mrb[0].mxu0
        %v2703 = vadd.f32 %v2542, %v2702
        %v2704 = vpop.f32.mrb[0].mxu0
        %2705 = vmatprep.mubr.bf16.mxu0 %v2162
        %2706 = vmatmul.mubr.bf16.gmra.mrb[0].mxu0 %v2161
        %v2707 = vpop.f32.mrb[0].mxu0
        %v2708 = vadd.f32 %v2547, %v2707
        %v2709 = vpop.f32.mrb[0].mxu0
        %v2710 = vpop.f32.mrb[0].mxu0
        %v2711 = vadd.f32 %v2550, %v2710
        %v2712 = vpop.f32.mrb[0].mxu0
        %2713 = vmatprep.mubr.bf16.mxu0 %v2166
        %2714 = vmatmul.mubr.bf16.gmra.mrb[0].mxu0 %v2165
        %v2715 = vpop.f32.mrb[0].mxu0
        %v2716 = vadd.f32 %v2555, %v2715
        %v2717 = vpop.f32.mrb[0].mxu0
        %v2718 = vpop.f32.mrb[0].mxu0
        %v2719 = vadd.f32 %v2558, %v2718
        %v2720 = vpop.f32.mrb[0].mxu0
        %2721 = vmatprep.mubr.bf16.mxu0 %v2170
        %2722 = vmatmul.mubr.bf16.gmra.mrb[0].mxu0 %v2169
        %v2723 = vpop.f32.mrb[0].mxu0
        %v2724 = vadd.f32 %v2563, %v2723
        %v2725 = vpop.f32.mrb[0].mxu0
        %v2726 = vpop.f32.mrb[0].mxu0
        %v2727 = vadd.f32 %v2566, %v2726
        %v2728 = vpop.f32.mrb[0].mxu0
        %2729 = vmatprep.mubr.bf16.mxu0 %v2174
        %2730 = vmatmul.mubr.bf16.gmra.mrb[0].mxu0 %v2173
        %v2731 = vpop.f32.mrb[0].mxu0
        %v2732 = vadd.f32 %v2571, %v2731
        %v2733 = vpop.f32.mrb[0].mxu0
        %v2734 = vpop.f32.mrb[0].mxu0
        %v2735 = vadd.f32 %v2574, %v2734
        %v2736 = vpop.f32.mrb[0].mxu0
        %2737 = vmatprep.mubr.bf16.mxu0 %v2178
        %2738 = vmatmul.mubr.bf16.gmra.mrb[0].mxu0 %v2177
        %v2739 = vpop.f32.mrb[0].mxu0
        %v2740 = vadd.f32 %v2579, %v2739
        %v2741 = vpop.f32.mrb[0].mxu0
        %v2742 = vpop.f32.mrb[0].mxu0
        %v2743 = vadd.f32 %v2582, %v2742
        %v2744 = vpop.f32.mrb[0].mxu0
        %2745 = vmatprep.mubr.bf16.mxu0 %v2182
        %2746 = vmatmul.mubr.bf16.gmra.mrb[0].mxu0 %v2181
        %v2747 = vpop.f32.mrb[0].mxu0
        %v2748 = vadd.f32 %v2587, %v2747
        %v2749 = vpop.f32.mrb[0].mxu0
        %v2750 = vpop.f32.mrb[0].mxu0
        %v2751 = vadd.f32 %v2590, %v2750
        %v2752 = vpop.f32.mrb[0].mxu0
        %2753 = vmatprep.mubr.bf16.mxu0 %v2186
        %2754 = vmatmul.mubr.bf16.gmra.mrb[0].mxu0 %v2185
        %v2755 = vpop.f32.mrb[0].mxu0
        %v2756 = vadd.f32 %v2595, %v2755
        %v2757 = vpop.f32.mrb[0].mxu0
        %v2758 = vpop.f32.mrb[0].mxu0
        %v2759 = vadd.f32 %v2598, %v2758
        %v2760 = vpop.f32.mrb[0].mxu0
        %2761 = vmatprep.mubr.bf16.mxu0 %v2190
        %2762 = vmatmul.mubr.bf16.gmra.mrb[0].mxu0 %v2189
        %v2763 = vpop.f32.mrb[0].mxu0
        %v2764 = vadd.f32 %v2603, %v2763
        %v2765 = vpop.f32.mrb[0].mxu0
        %v2766 = vpop.f32.mrb[0].mxu0
        %v2767 = vadd.f32 %v2606, %v2766
        %v2768 = vpop.f32.mrb[0].mxu0
        %2769 = vmatprep.mubr.bf16.mxu0 %v2194
        %2770 = vmatmul.mubr.bf16.gmra.mrb[0].mxu0 %v2193
        %v2771 = vpop.f32.mrb[0].mxu0
        %v2772 = vadd.f32 %v2611, %v2771
        %v2773 = vpop.f32.mrb[0].mxu0
        %v2774 = vpop.f32.mrb[0].mxu0
        %v2775 = vadd.f32 %v2614, %v2774
        %v2776 = vpop.f32.mrb[0].mxu0
        %2777 = vdwg.mxu0
        %v2778 = vld [vmem:[%s246] sm:$0xff]
        %v2779 = vld [vmem:[%s246 + $0x8] sm:$0xff]
        %v2780 = vld [vmem:[%s246 + $0x10] sm:$0xff]
        %v2781 = vld [vmem:[%s246 + $0x18] sm:$0xff]
        %v2782 = vld [vmem:[%s246 + $0x20] sm:$0xff]
        %v2783 = vld [vmem:[%s246 + $0x28] sm:$0xff]
        %v2784 = vld [vmem:[%s246 + $0x30] sm:$0xff]
        %v2785 = vld [vmem:[%s246 + $0x38] sm:$0xff]
        %v2786 = vld [vmem:[%s246 + $0x40] sm:$0xff]
        %v2787 = vld [vmem:[%s246 + $0x48] sm:$0xff]
        %v2788 = vld [vmem:[%s246 + $0x50] sm:$0xff]
        %v2789 = vld [vmem:[%s246 + $0x58] sm:$0xff]
        %v2790 = vld [vmem:[%s246 + $0x60] sm:$0xff]
        %v2791 = vld [vmem:[%s246 + $0x68] sm:$0xff]
        %v2792 = vld [vmem:[%s246 + $0x70] sm:$0xff]
        %v2793 = vld [vmem:[%s246 + $0x78] sm:$0xff]
        %v2794 = vld [vmem:[%s246 + $0x80] sm:$0xff]
        %v2795 = vld [vmem:[%s246 + $0x88] sm:$0xff]
        %v2796 = vld [vmem:[%s246 + $0x90] sm:$0xff]
        %v2797 = vld [vmem:[%s246 + $0x98] sm:$0xff]
        %v2798 = vld [vmem:[%s246 + $0xa0] sm:$0xff]
        %v2799 = vld [vmem:[%s246 + $0xa8] sm:$0xff]
        %v2800 = vld [vmem:[%s246 + $0xb0] sm:$0xff]
        %v2801 = vld [vmem:[%s246 + $0xb8] sm:$0xff]
        %v2802 = vld [vmem:[%s246 + $0xc0] sm:$0xff]
        %v2803 = vld [vmem:[%s246 + $0xc8] sm:$0xff]
        %v2804 = vld [vmem:[%s246 + $0xd0] sm:$0xff]
        %v2805 = vld [vmem:[%s246 + $0xd8] sm:$0xff]
        %v2806 = vld [vmem:[%s246 + $0xe0] sm:$0xff]
        %v2807 = vld [vmem:[%s246 + $0xe8] sm:$0xff]
        %v2808 = vld [vmem:[%s246 + $0xf0] sm:$0xff]
        %v2809 = vld [vmem:[%s246 + $0xf8] sm:$0xff]
        %v2810 = vadd.f32 %v2778, %v2652
        %v2811 = vadd.f32 %v2779, %v2655
        %v2812 = vadd.f32 %v2780, %v2660
        %v2813 = vadd.f32 %v2781, %v2663
        %v2814 = vadd.f32 %v2782, %v2668
        %v2815 = vadd.f32 %v2783, %v2671
        %v2816 = vadd.f32 %v2784, %v2676
        %v2817 = vadd.f32 %v2785, %v2679
        %v2818 = vadd.f32 %v2786, %v2684
        %v2819 = vadd.f32 %v2787, %v2687
        %v2820 = vadd.f32 %v2788, %v2692
        %v2821 = vadd.f32 %v2789, %v2695
        %v2822 = vadd.f32 %v2790, %v2700
        %v2823 = vadd.f32 %v2791, %v2703
        %v2824 = vadd.f32 %v2792, %v2708
        %v2825 = vadd.f32 %v2793, %v2711
        %v2826 = vadd.f32 %v2794, %v2716
        %v2827 = vadd.f32 %v2795, %v2719
        %v2828 = vadd.f32 %v2796, %v2724
        %v2829 = vadd.f32 %v2797, %v2727
        %v2830 = vadd.f32 %v2798, %v2732
        %v2831 = vadd.f32 %v2799, %v2735
        %v2832 = vadd.f32 %v2800, %v2740
        %v2833 = vadd.f32 %v2801, %v2743
        %v2834 = vadd.f32 %v2802, %v2748
        %v2835 = vadd.f32 %v2803, %v2751
        %v2836 = vadd.f32 %v2804, %v2756
        %v2837 = vadd.f32 %v2805, %v2759
        %v2838 = vadd.f32 %v2806, %v2764
        %v2839 = vadd.f32 %v2807, %v2767
        %v2840 = vadd.f32 %v2808, %v2772
        %v2841 = vadd.f32 %v2809, %v2775
        %2842 = vst [vmem:[%s284] sm:$0xff] %v2810
        %2843 = vst [vmem:[%s284 + $0x8] sm:$0xff] %v2811
        %2844 = vst [vmem:[%s284 + $0x10] sm:$0xff] %v2812
        %2845 = vst [vmem:[%s284 + $0x18] sm:$0xff] %v2813
        %2846 = vst [vmem:[%s284 + $0x20] sm:$0xff] %v2814
        %2847 = vst [vmem:[%s284 + $0x28] sm:$0xff] %v2815
        %2848 = vst [vmem:[%s284 + $0x30] sm:$0xff] %v2816
        %2849 = vst [vmem:[%s284 + $0x38] sm:$0xff] %v2817
        %2850 = vst [vmem:[%s284 + $0x40] sm:$0xff] %v2818
        %2851 = vst [vmem:[%s284 + $0x48] sm:$0xff] %v2819
        %2852 = vst [vmem:[%s284 + $0x50] sm:$0xff] %v2820
        %2853 = vst [vmem:[%s284 + $0x58] sm:$0xff] %v2821
        %2854 = vst [vmem:[%s284 + $0x60] sm:$0xff] %v2822
        %2855 = vst [vmem:[%s284 + $0x68] sm:$0xff] %v2823
        %2856 = vst [vmem:[%s284 + $0x70] sm:$0xff] %v2824
        %2857 = vst [vmem:[%s284 + $0x78] sm:$0xff] %v2825
        %2858 = vst [vmem:[%s284 + $0x80] sm:$0xff] %v2826
        %2859 = vst [vmem:[%s284 + $0x88] sm:$0xff] %v2827
        %2860 = vst [vmem:[%s284 + $0x90] sm:$0xff] %v2828
        %2861 = vst [vmem:[%s284 + $0x98] sm:$0xff] %v2829
        %2862 = vst [vmem:[%s284 + $0xa0] sm:$0xff] %v2830
        %2863 = vst [vmem:[%s284 + $0xa8] sm:$0xff] %v2831
        %2864 = vst [vmem:[%s284 + $0xb0] sm:$0xff] %v2832
        %2865 = vst [vmem:[%s284 + $0xb8] sm:$0xff] %v2833
        %2866 = vst [vmem:[%s284 + $0xc0] sm:$0xff] %v2834
        %2867 = vst [vmem:[%s284 + $0xc8] sm:$0xff] %v2835
        %2868 = vst [vmem:[%s284 + $0xd0] sm:$0xff] %v2836
        %2869 = vst [vmem:[%s284 + $0xd8] sm:$0xff] %v2837
        %2870 = vst [vmem:[%s284 + $0xe0] sm:$0xff] %v2838
        %2871 = vst [vmem:[%s284 + $0xe8] sm:$0xff] %v2839
        %2872 = vst [vmem:[%s284 + $0xf0] sm:$0xff] %v2840
        %2873 = vst [vmem:[%s284 + $0xf8] sm:$0xff] %v2841
        %s2874 = sand.u32 %s142, 1
        %s2875 = scalar_lea.sflag [#allocation5], %s2874
        %s2876 = sand.u32 %s142, 1
        %s2877 = smul.addr %s2876, 256
        %s2878 = scalar_lea.vmem [#allocation11], %s2877
        // Predicated region
        $region57: #{tpu_custom_call.1} parent=39 // pred_check
          %p2879 = pneg %p152
        $region58: #{tpu_custom_call.1} parent=39 // pred_check_branch
          %2881 = sbr.rel (%p2879) target = $region60
        $region59: #{tpu_custom_call.1} parent=39 // pred_region
          %s2882 = smul.u32 32, %s24
          %s2884 = ssub.s32 4096, 4096
          %2885 = vsyncadd %s2875, %s2884
          %s2886 = smul.addr %s2882, 128
          %s2887 = scalar_lea.hbm %s5, %s2886
          %s2888 = sshll.u32 %s2878, 4
          %s2889 = int_to_ptr.vmem [resolvable:$true] %s2888
          %2894 = dma.vmem_to_hbm [thread:$0]  %s2889, 4096, %s2887, %s2875, 128, 128, 8
        $region60: #{tpu_custom_call.1} parent=39 // pred_fallthru
          _
      $region40: #{tpu_custom_call.1} parent=5 // pred_fallthru
        _
      %p2895 = scmp.le.s32.totalorder 2, %s19
      // Predicated region
      $region61: #{tpu_custom_call.1} parent=5 // pred_check
        %p2896 = pneg %p2895
      $region62: #{tpu_custom_call.1} parent=5 // pred_check_branch
        %2898 = sbr.rel (%p2896) target = $region64
      $region63: #{tpu_custom_call.1} parent=5 // pred_region
        %s2899 = ssub.s32 %s19, 2
        // Predicated region
        $region65: #{tpu_custom_call.1} parent=63 // pred_check
          %p2900 = pneg %p158
        $region66: #{tpu_custom_call.1} parent=63 // pred_check_branch
          %2902 = sbr.rel (%p2900) target = $region68
        $region67: #{tpu_custom_call.1} parent=63 // pred_region
          %s2903 = sand.u32 %s143, 1
          %s2904 = scalar_lea.sflag [#allocation5], %s2903
          %s2905 = sand.u32 %s143, 1
          %s2906 = smul.addr %s2905, 256
          %s2907 = scalar_lea.vmem [#allocation11], %s2906
          %2908 = dma.done %s2904, 4096
        $region68: #{tpu_custom_call.1} parent=63 // pred_fallthru
          _
      $region64: #{tpu_custom_call.1} parent=5 // pred_fallthru
        _
    $region6: #{tpu_custom_call.1} parent=1 // loop_footer
      %s23 = sadd.s32 1, %s19
    $region7: #{tpu_custom_call.1} parent=1 // loop_footer_branch
      %18 = sbr.rel target = $region3
    $region8: #{tpu_custom_call.1} parent=1 // loop_exit
      _
    %2909 = vsyncpa [#allocation4], 1
    %s2910 = scalar_lea.sflag [#allocation4], 1
    %2911 = vsyncpa %s2910, 1
    %2912 = vsyncpa [#allocation7], 1
    %2913 = vsyncpa [#allocation10], 1
    %2914 = vsyncpa [#allocation5], 1
    %s2915 = scalar_lea.sflag [#allocation5], 1
    %2916 = vsyncpa %s2915, 1

</llo_original>
